<compile_context>
chip_gen: v6e
topology: v6e:2x2x1
jax: 0.10.0
libtpu: 0.0.40
codegen_flags: <defaults>
</compile_context>

<pallas_src>
import functools
import math

import numpy as np
import jax
import jax.numpy as jnp
from jax.experimental import pallas as pl
from jax.experimental.pallas import tpu as pltpu

_INV_SQRT2 = 1.0 / math.sqrt(2.0)


def _gelu(x):
    # exact GELU (erf form), matching torch.nn.GELU() default (approximate='none')
    return 0.5 * x * (1.0 + jax.lax.erf(x * _INV_SQRT2))


def _round_up(n, m=128):
    return ((n + m - 1) // m) * m


def _pad_to(x, shape):
    return jnp.pad(x, [(0, s - d) for d, s in zip(x.shape, shape)])


def _nbytes(shape, dtype):
    return int(np.prod(shape)) * np.dtype(dtype).itemsize


def _compiler_params(semantics, block_bytes, scratch_bytes=0):
    # Scoped-VMEM limit sized from the (double-buffered) blocks + scratch with
    # headroom, clamped to [32 MiB, 128 MiB].
    est = 2 * int(sum(block_bytes)) + int(scratch_bytes)
    limit = min(max(int(est * 1.5) + (8 << 20), 32 << 20), 128 << 20)
    return pltpu.CompilerParams(dimension_semantics=semantics,
                                vmem_limit_bytes=limit)


# ----------------------------------------------------------------------------
# Fused conv_in: Conv1d(k=3, pad=1) + GELU + Conv1d(k=3, pad=1)
# Input is pre-padded in time by 2 on each side so all taps are static slices.
# ----------------------------------------------------------------------------
def _conv_in_kernel(x_ref, w1_ref, b1_ref, w2_ref, b2_ref, o_ref, *, T):
    Tp = T + 2                                   # conv1 output incl. 1-row halo
    xp = x_ref[...]                              # (T+4, Cin) bf16
    Cb = w1_ref.shape[2]
    H = w2_ref.shape[2]

    acc1 = jnp.zeros((Tp, Cb), jnp.float32)
    for k in range(3):
        acc1 = acc1 + jnp.dot(xp[k:k + Tp, :], w1_ref[k],
                              preferred_element_type=jnp.float32)
    h = _gelu(acc1 + b1_ref[...])
    # Conv2's zero padding applies to the GELU(conv1) output: rows 0 and T+1
    # (positions t=-1 and t=T) must be exactly zero, not GELU(conv1(halo)+b1).
    row = jax.lax.broadcasted_iota(jnp.int32, (Tp, 1), 0)
    h = jnp.where((row >= 1) & (row <= T), h, 0.0).astype(jnp.bfloat16)

    acc2 = jnp.zeros((T, H), jnp.float32)
    for k in range(3):
        acc2 = acc2 + jnp.dot(h[k:k + T, :], w2_ref[k],
                              preferred_element_type=jnp.float32)
    o_ref[...] = (acc2 + b2_ref[...]).astype(o_ref.dtype)


def conv_in_fused(x, w1, b1, w2, b2):
    """x: (B, T+4, Cin) bf16; w1: (3, Cin, Cb) bf16; w2: (3, Cb, H) bf16."""
    B, Tp4, Cin = x.shape
    T = Tp4 - 4
    Cb = w1.shape[2]
    H = w2.shape[2]
    blocks = [_nbytes((Tp4, Cin), jnp.bfloat16),
              _nbytes(w1.shape, jnp.bfloat16), _nbytes(b1.shape, jnp.float32),
              _nbytes(w2.shape, jnp.bfloat16), _nbytes(b2.shape, jnp.float32),
              _nbytes((T, H), jnp.bfloat16)]
    return pl.pallas_call(
        functools.partial(_conv_in_kernel, T=T),
        out_shape=jax.ShapeDtypeStruct((B, T, H), jnp.bfloat16),
        grid=(B,),
        in_specs=[
            pl.BlockSpec((None, Tp4, Cin), lambda i: (i, 0, 0)),
            pl.BlockSpec((3, Cin, Cb), lambda i: (0, 0, 0)),
            pl.BlockSpec((1, Cb), lambda i: (0, 0)),
            pl.BlockSpec((3, Cb, H), lambda i: (0, 0, 0)),
            pl.BlockSpec((1, H), lambda i: (0, 0)),
        ],
        out_specs=pl.BlockSpec((None, T, H), lambda i: (i, 0, 0)),
        compiler_params=_compiler_params(("parallel",), blocks),
    )(x, w1, b1, w2, b2)


# ----------------------------------------------------------------------------
# All ConvNeXt blocks in ONE pallas_call: grid=(B, n_layer).
#  - activation resident in a zero-haloed f32 VMEM scratch across layers,
#  - w1/w2 stacked over layers, VMEM-resident (constant index_map), indexed
#    in-kernel by program_id(1),
#  - small per-layer params packed into one (kernel+5, C) block,
#  - output written to HBM-bound buffer only on the last layer.
# NOTE: the layer-to-layer carry in `buf` requires the layer axis to be the
# innermost grid axis and to stay "arbitrary" (sequential); do not reorder.
# ----------------------------------------------------------------------------
def _convnext_stack_kernel(x_ref, p_ref, b1_ref, w1_ref, w2_ref, o_ref, buf,
                           *, T, kernel, dilation, c_true):
    halo = dilation * (kernel // 2)
    C = x_ref.shape[1]
    l = pl.program_id(1)
    n_layer = pl.num_programs(1)

    @pl.when(l == 0)
    def _():
        buf[0:halo, :] = jnp.zeros((halo, C), jnp.float32)
        buf[T + halo:T + 2 * halo, :] = jnp.zeros((halo, C), jnp.float32)
        buf[halo:halo + T, :] = x_ref[...].astype(jnp.float32)

    xp = buf[...]                                 # (T + 2*halo, C) f32
    x = xp[halo:halo + T, :]                      # residual

    p = p_ref[...]                                # rows: dw_w(K), dw_b, ln_w, ln_b, b2, gamma
    dw_b = p[kernel:kernel + 1]
    ln_w = p[kernel + 1:kernel + 2]
    ln_b = p[kernel + 2:kernel + 3]
    b2 = p[kernel + 3:kernel + 4]
    gamma = p[kernel + 4:kernel + 5]

    # depthwise conv (groups=C) on the VPU, f32
    acc = jnp.zeros((T, C), jnp.float32)
    for k in range(kernel):
        s = k * dilation
        acc = acc + xp[s:s + T, :] * p[k:k + 1, :]
    y = acc + dw_b

    # LayerNorm over the true (unpadded) channel count, eps=1e-6 (biased var).
    inv_c = 1.0 / float(c_true)
    mean = jnp.sum(y, axis=-1, keepdims=True) * inv_c
    cen = y - mean
    sq = jnp.sum(cen * cen, axis=-1, keepdims=True)
    if C != c_true:                               # padded lanes add mean^2 each
        sq = sq - float(C - c_true) * mean * mean
    yn = cen * jax.lax.rsqrt(sq * inv_c + 1e-6) * ln_w + ln_b

    # pointwise MLP: bf16 MXU operands, f32 accumulation; w1/w2 are resident
    # full-L VMEM blocks indexed by the layer id.
    w1 = w1_ref[l]
    w2 = w2_ref[l]
    h = jnp.dot(yn.astype(jnp.bfloat16), w1, preferred_element_type=jnp.float32)
    h = _gelu(h + b1_ref[...]).astype(jnp.bfloat16)
    z = jnp.dot(h, w2, preferred_element_type=jnp.float32) + b2

    out = x + z * gamma

    @pl.when(l < n_layer - 1)
    def _():
        buf[halo:halo + T, :] = out               # carry to next layer

    @pl.when(l == n_layer - 1)
    def _():
        o_ref[...] = out.astype(o_ref.dtype)      # single store per batch elem


def convnext_stack(x, blk_p, blk_b1, blk_w1, blk_w2, *, kernel, dilation, c_true):
    """x: (B, T, C) bf16; runs all ConvNeXt layers in one pallas_call."""
    B, T, C = x.shape
    L, _, H4 = blk_w1.shape
    halo = dilation * (kernel // 2)
    blocks = [_nbytes((T, C), jnp.bfloat16),
              _nbytes((kernel + 5, C), jnp.float32),
              _nbytes((1, H4), jnp.float32),
              _nbytes(blk_w1.shape, jnp.bfloat16),
              _nbytes(blk_w2.shape, jnp.bfloat16),
              _nbytes((T, C), jnp.bfloat16)]
    scratch = _nbytes((T + 2 * halo, C), jnp.float32)
    kern = functools.partial(_convnext_stack_kernel, T=T, kernel=kernel,
                             dilation=dilation, c_true=c_true)
    return pl.pallas_call(
        kern,
        out_shape=jax.ShapeDtypeStruct((B, T, C), jnp.bfloat16),
        grid=(B, L),
        in_specs=[
            pl.BlockSpec((None, T, C), lambda b, l: (b, 0, 0)),            # act
            pl.BlockSpec((None, kernel + 5, C), lambda b, l: (l, 0, 0)),   # packed
            pl.BlockSpec((None, 1, H4), lambda b, l: (l, 0, 0)),           # b1
            pl.BlockSpec((L, C, H4), lambda b, l: (0, 0, 0)),              # w1 resident
            pl.BlockSpec((L, H4, C), lambda b, l: (0, 0, 0)),              # w2 resident
        ],
        out_specs=pl.BlockSpec((None, T, C), lambda b, l: (b, 0, 0)),
        scratch_shapes=[pltpu.VMEM((T + 2 * halo, C), jnp.float32)],
        compiler_params=_compiler_params(("parallel", "arbitrary"), blocks, scratch),
    )(x, blk_p, blk_b1, blk_w1, blk_w2)


# ----------------------------------------------------------------------------
# Fused tail: decoder conv_out (1x1, no bias) ∘ DVAE out_conv (k=3, pad=1,
# no bias) ∘ coef, pre-composed into a single K=3 weight (lane-padded Cout).
# ----------------------------------------------------------------------------
def _tail_kernel(x_ref, w_ref, o_ref, *, T, K):
    xp = x_ref[...]                               # (T+K-1, H) bf16
    Cout = o_ref.shape[1]
    acc = jnp.zeros((T, Cout), jnp.float32)
    for k in range(K):
        acc = acc + jnp.dot(xp[k:k + T, :], w_ref[k],
                            preferred_element_type=jnp.float32)
    o_ref[...] = acc


def tail_conv_fused(x, wf):
    """x: (B, T+K-1, H) bf16 (time pre-padded); wf: (K, H, Cout_p) bf16."""
    B, Tp, H = x.shape
    K, _, Cout = wf.shape
    T = Tp - (K - 1)
    blocks = [_nbytes((Tp, H), jnp.bfloat16),
              _nbytes(wf.shape, jnp.bfloat16),
              _nbytes((T, Cout), jnp.float32)]
    return pl.pallas_call(
        functools.partial(_tail_kernel, T=T, K=K),
        out_shape=jax.ShapeDtypeStruct((B, T, Cout), jnp.float32),
        grid=(B,),
        in_specs=[
            pl.BlockSpec((None, Tp, H), lambda i: (i, 0, 0)),
            pl.BlockSpec((K, H, Cout), lambda i: (0, 0, 0)),
        ],
        out_specs=pl.BlockSpec((None, T, Cout), lambda i: (i, 0, 0)),
        compiler_params=_compiler_params(("parallel",), blocks),
    )(x, wf)


# ----------------------------------------------------------------------------
# One-time weight preprocessing (hoisted out of the jitted forward).
# ----------------------------------------------------------------------------
def prepare_params(P, *, kernel):
    idim = P["ci0_w"].shape[1]
    bn = P["ci0_w"].shape[2]
    hidden = P["ci1_w"].shape[2]
    inter = P["blocks"][0]["w1"].shape[1]
    out_ch = P["out_w"].shape[2]
    idim_p, bn_p, hid_p, inter_p, out_p = (
        _round_up(idim), _round_up(bn), _round_up(hidden),
        _round_up(inter), _round_up(out_ch))

    W = {
        "ci0_w": _pad_to(P["ci0_w"], (3, idim_p, bn_p)).astype(jnp.bfloat16),
        "ci0_b": _pad_to(P["ci0_b"], (1, bn_p)),
        "ci1_w": _pad_to(P["ci1_w"], (3, bn_p, hid_p)).astype(jnp.bfloat16),
        "ci1_b": _pad_to(P["ci1_b"], (1, hid_p)),
    }

    pk, b1s, w1s, w2s = [], [], [], []
    for b in P["blocks"]:
        rows = [
            _pad_to(b["dw_w"][:, 0, :], (kernel, hid_p)),
            _pad_to(b["dw_b"], (1, hid_p)),
            _pad_to(b["ln_w"], (1, hid_p)),
            _pad_to(b["ln_b"], (1, hid_p)),
            _pad_to(b["b2"], (1, hid_p)),
            _pad_to(b["gamma"], (1, hid_p)),
        ]
        pk.append(jnp.concatenate(rows, axis=0))
        b1s.append(_pad_to(b["b1"], (1, inter_p)))
        w1s.append(_pad_to(b["w1"], (hid_p, inter_p)))
        w2s.append(_pad_to(b["w2"], (inter_p, hid_p)))
    W["blk_p"] = jnp.stack(pk)                                  # (L, K+5, C)
    W["blk_b1"] = jnp.stack(b1s)                                # (L, 1, 4C)
    W["blk_w1"] = jnp.stack(w1s).astype(jnp.bfloat16)           # (L, C, 4C)
    W["blk_w2"] = jnp.stack(w2s).astype(jnp.bfloat16)           # (L, 4C, C)

    # Fused tail weight: Wf[k] = co_w @ out_w[k], coef folded in.
    wf = jnp.einsum("io,koc->kic", P["co_w"][0], P["out_w"],
                    precision=jax.lax.Precision.HIGHEST)
    wf = wf * P["coef"][0][None, None, :]
    W["tail_w"] = _pad_to(wf, (3, hid_p, out_p)).astype(jnp.bfloat16)

    meta = dict(idim=idim, idim_p=idim_p, hidden=hidden, hid_p=hid_p,
                out_ch=out_ch)
    return W, meta


# ----------------------------------------------------------------------------
# DVAE decode forward (glue around the Pallas kernels)
# ----------------------------------------------------------------------------
def dvae_decode(inp, W, *, meta, kernel=7, dilation=2):
    """inp: (B, C, T) in PyTorch NCT layout; returns (B, 100, 2T)."""
    B, C, T = inp.shape
    # vq_feats.view(B,2,C//2,T).permute(0,2,3,1).flatten(2), then NCT -> NTC
    vq = inp.reshape(B, 2, C // 2, T).transpose(0, 2, 3, 1).reshape(B, C // 2, 2 * T)
    x = jnp.transpose(vq, (0, 2, 1))                            # (B, 2T, idim)
    # lane-pad channels to 128, time-pad by 2 (conv_in halo), bf16 handoff
    x = jnp.pad(x, ((0, 0), (2, 2), (0, meta["idim_p"] - meta["idim"])))
    x = x.astype(jnp.bfloat16)

    h = conv_in_fused(x, W["ci0_w"], W["ci0_b"], W["ci1_w"], W["ci1_b"])
    h = convnext_stack(h, W["blk_p"], W["blk_b1"], W["blk_w1"], W["blk_w2"],
                       kernel=kernel, dilation=dilation, c_true=meta["hidden"])
    hp = jnp.pad(h, ((0, 0), (1, 1), (0, 0)))                   # tail conv halo
    y = tail_conv_fused(hp, W["tail_w"])[:, :, :meta["out_ch"]]
    return jnp.transpose(y, (0, 2, 1))                          # back to NCT


def init_params(key, *, idim, odim, bn_dim, hidden, n_layer, kernel, out_ch=100):
    ks = iter(jax.random.split(key, 64))

    def w(shape, fan_in):
        return jax.random.normal(next(ks), shape, jnp.float32) / jnp.sqrt(float(fan_in))

    P = {}
    P["ci0_w"] = w((3, idim, bn_dim), 3 * idim)
    P["ci0_b"] = w((1, bn_dim), bn_dim)
    P["ci1_w"] = w((3, bn_dim, hidden), 3 * bn_dim)
    P["ci1_b"] = w((1, hidden), hidden)
    inter = hidden * 4
    blocks = []
    for _ in range(n_layer):
        blocks.append({
            "dw_w": w((kernel, 1, hidden), kernel),
            "dw_b": w((1, hidden), hidden),
            "ln_w": jnp.ones((1, hidden), jnp.float32),
            "ln_b": jnp.zeros((1, hidden), jnp.float32),
            "w1": w((hidden, inter), hidden),
            "b1": w((1, inter), inter),
            "w2": w((inter, hidden), inter),
            "b2": w((1, hidden), hidden),
            "gamma": jnp.full((1, hidden), 1e-6, jnp.float32),
        })
    P["blocks"] = blocks
    P["co_w"] = w((1, hidden, odim), hidden)        # decoder conv_out, bias=False
    P["out_w"] = w((3, odim, out_ch), 3 * odim)     # DVAE out_conv, bias=False
    P["coef"] = jax.random.uniform(next(ks), (1, out_ch), jnp.float32)  # torch.rand(100)
    return P


# ----------------------------------------------------------------------------
# Pure-JAX reference (lax.conv_general_dilated, f32 HIGHEST) for correctness
# ----------------------------------------------------------------------------
def _conv_ref(x, w_kio, b, pad, dilation=1, groups=1):
    w = jnp.transpose(w_kio, (2, 1, 0))   # (Cout, Cin/groups, K) — torch layout
    y = jax.lax.conv_general_dilated(
        x, w, window_strides=(1,), padding=[(pad, pad)],
        rhs_dilation=(dilation,), dimension_numbers=("NCH", "OIH", "NCH"),
        feature_group_count=groups, precision=jax.lax.Precision.HIGHEST)
    if b is not None:
        y = y + b[0][None, :, None]
    return y


def dvae_ref(inp, P, *, kernel=7, dilation=2):
    B, C, T = inp.shape
    hidden = P["ci1_w"].shape[2]
    vq = inp.reshape(B, 2, C // 2, T).transpose(0, 2, 3, 1).reshape(B, C // 2, 2 * T)
    y = _conv_ref(vq, P["ci0_w"], P["ci0_b"], pad=1)
    y = jax.nn.gelu(y, approximate=False)
    y = _conv_ref(y, P["ci1_w"], P["ci1_b"], pad=1)
    for blk in P["blocks"]:
        res = y
        h = _conv_ref(y, blk["dw_w"], blk["dw_b"], pad=dilation * (kernel // 2),
                      dilation=dilation, groups=hidden)
        h = jnp.transpose(h, (0, 2, 1))
        mean = jnp.mean(h, -1, keepdims=True)
        var = jnp.mean((h - mean) ** 2, -1, keepdims=True)
        h = (h - mean) / jnp.sqrt(var + 1e-6) * blk["ln_w"][0] + blk["ln_b"][0]
        h = jnp.einsum("btc,ch->bth", h, blk["w1"],
                       precision=jax.lax.Precision.HIGHEST) + blk["b1"][0]
        h = jax.nn.gelu(h, approximate=False)
        h = jnp.einsum("bth,hc->btc", h, blk["w2"],
                       precision=jax.lax.Precision.HIGHEST) + blk["b2"][0]
        h = h * blk["gamma"][0]
        y = jnp.transpose(h, (0, 2, 1)) + res
    y = _conv_ref(y, P["co_w"], None, pad=0)
    y = _conv_ref(y, P["out_w"], None, pad=1)
    return y * P["coef"][0][None, :, None]


if __name__ == "__main__":
    # Small, module-consistent shapes: inp (B, C_vq, T) -> output (B, 100, 2T)
    B, C, T = 2, 32, 8
    dim = 64
    cfg = dict(idim=C // 2, odim=dim, n_layer=3, bn_dim=32, hidden=64,
               kernel=7, dilation=2)

    key = jax.random.PRNGKey(0)
    k_inp, k_par = jax.random.split(key)
    inp = jax.random.normal(k_inp, (B, C, T), jnp.float32)
    P = init_params(k_par, idim=cfg["idim"], odim=cfg["odim"],
                    bn_dim=cfg["bn_dim"], hidden=cfg["hidden"],
                    n_layer=cfg["n_layer"], kernel=cfg["kernel"])

    # Weight preprocessing (pad/stack/pack/fuse/cast) happens ONCE, outside jit.
    W, meta = prepare_params(P, kernel=cfg["kernel"])

    decode_fn = jax.jit(functools.partial(dvae_decode, meta=meta,
                                          kernel=cfg["kernel"],
                                          dilation=cfg["dilation"]))
    out = jax.block_until_ready(decode_fn(inp, W))
    assert out.shape == (B, 100, 2 * T), out.shape

    ref = dvae_ref(inp, P, kernel=cfg["kernel"], dilation=cfg["dilation"])
    out_np, ref_np = np.asarray(out), np.asarray(ref)
    # bf16 MXU operands + bf16 handoffs vs f32-HIGHEST reference.
    np.testing.assert_allclose(out_np, ref_np, rtol=3e-2, atol=3e-2)
    # boundary-focused check (review: the conv_in halo bug lived here)
    np.testing.assert_allclose(out_np[:, :, :2], ref_np[:, :, :2], rtol=3e-2, atol=3e-2)
    np.testing.assert_allclose(out_np[:, :, -2:], ref_np[:, :, -2:], rtol=3e-2, atol=3e-2)

    print("KERNEL_OK")
</pallas_src>

<mosaic_0001>
module attributes {stable_mosaic.version = 11 : i64} {
  func.func @_conv_in_kernel(%arg0: i32, %arg1: memref<1x20x128xbf16, #tpu.memory_space<vmem>>, %arg2: memref<3x128x128xbf16, #tpu.memory_space<vmem>>, %arg3: memref<1x128xf32, #tpu.memory_space<vmem>>, %arg4: memref<3x128x128xbf16, #tpu.memory_space<vmem>>, %arg5: memref<1x128xf32, #tpu.memory_space<vmem>>, %arg6: memref<1x16x128xbf16, #tpu.memory_space<vmem>>) attributes {dimension_semantics = [#tpu.dimension_semantics<parallel>], iteration_bounds = array<i64: 2>, scalar_prefetch = 0 : i64, scratch_operands = 0 : i64, tpu.core_type = #tpu.core_type<tc>, window_params = [{transform_indices = @transform_0, window_bounds = array<i64: 1, 20, 128>}, {pipeline_mode = #tpu.pipeline_mode<synchronous>, transform_indices = @transform_1, window_bounds = array<i64: 3, 128, 128>}, {pipeline_mode = #tpu.pipeline_mode<synchronous>, transform_indices = @transform_2, window_bounds = array<i64: 1, 128>}, {pipeline_mode = #tpu.pipeline_mode<synchronous>, transform_indices = @transform_3, window_bounds = array<i64: 3, 128, 128>}, {pipeline_mode = #tpu.pipeline_mode<synchronous>, transform_indices = @transform_4, window_bounds = array<i64: 1, 128>}, {transform_indices = @transform_5, window_bounds = array<i64: 1, 16, 128>}]} {
    %c0 = arith.constant 0 : index
    %c0_0 = arith.constant 0 : index
    %c0_1 = arith.constant 0 : index
    %0 = vector.load %arg1[%c0, %c0_0, %c0_1] : memref<1x20x128xbf16, #tpu.memory_space<vmem>>, vector<1x20x128xbf16>
    %1 = vector.shape_cast %0 : vector<1x20x128xbf16> to vector<20x128xbf16>
    %cst = arith.constant 0.000000e+00 : f32
    %2 = vector.broadcast %cst : f32 to vector<18x128xf32>
    %3 = vector.extract_strided_slice %1 {offsets = [0, 0], sizes = [18, 128], strides = [1, 1]} : vector<20x128xbf16> to vector<18x128xbf16>
    %c0_2 = arith.constant 0 : index
    %c0_3 = arith.constant 0 : index
    %c0_4 = arith.constant 0 : index
    %4 = vector.load %arg2[%c0_2, %c0_3, %c0_4] : memref<3x128x128xbf16, #tpu.memory_space<vmem>>, vector<1x128x128xbf16>
    %5 = vector.shape_cast %4 : vector<1x128x128xbf16> to vector<128x128xbf16>
    %cst_5 = arith.constant dense<0.000000e+00> : vector<18x128xf32>
    %6 = tpu.matmul %3, %5, %cst_5 {dimension_numbers = #tpu.dot_dimension_numbers<[1], [0], [0], [1], [0, 0, 1, 1], [], []>} : vector<18x128xbf16>, vector<128x128xbf16>, vector<18x128xf32> -> vector<18x128xf32>
    %7 = arith.addf %2, %6 : vector<18x128xf32>
    %8 = vector.extract_strided_slice %1 {offsets = [1, 0], sizes = [18, 128], strides = [1, 1]} : vector<20x128xbf16> to vector<18x128xbf16>
    %c1 = arith.constant 1 : index
    %c0_6 = arith.constant 0 : index
    %c0_7 = arith.constant 0 : index
    %9 = vector.load %arg2[%c1, %c0_6, %c0_7] : memref<3x128x128xbf16, #tpu.memory_space<vmem>>, vector<1x128x128xbf16>
    %10 = vector.shape_cast %9 : vector<1x128x128xbf16> to vector<128x128xbf16>
    %cst_8 = arith.constant dense<0.000000e+00> : vector<18x128xf32>
    %11 = tpu.matmul %8, %10, %cst_8 {dimension_numbers = #tpu.dot_dimension_numbers<[1], [0], [0], [1], [0, 0, 1, 1], [], []>} : vector<18x128xbf16>, vector<128x128xbf16>, vector<18x128xf32> -> vector<18x128xf32>
    %12 = arith.addf %7, %11 : vector<18x128xf32>
    %13 = vector.extract_strided_slice %1 {offsets = [2, 0], sizes = [18, 128], strides = [1, 1]} : vector<20x128xbf16> to vector<18x128xbf16>
    %c2 = arith.constant 2 : index
    %c0_9 = arith.constant 0 : index
    %c0_10 = arith.constant 0 : index
    %14 = vector.load %arg2[%c2, %c0_9, %c0_10] : memref<3x128x128xbf16, #tpu.memory_space<vmem>>, vector<1x128x128xbf16>
    %15 = vector.shape_cast %14 : vector<1x128x128xbf16> to vector<128x128xbf16>
    %cst_11 = arith.constant dense<0.000000e+00> : vector<18x128xf32>
    %16 = tpu.matmul %13, %15, %cst_11 {dimension_numbers = #tpu.dot_dimension_numbers<[1], [0], [0], [1], [0, 0, 1, 1], [], []>} : vector<18x128xbf16>, vector<128x128xbf16>, vector<18x128xf32> -> vector<18x128xf32>
    %17 = arith.addf %12, %16 : vector<18x128xf32>
    %c0_12 = arith.constant 0 : index
    %c0_13 = arith.constant 0 : index
    %18 = vector.load %arg3[%c0_12, %c0_13] : memref<1x128xf32, #tpu.memory_space<vmem>>, vector<1x128xf32>
    %19 = vector.broadcast %18 : vector<1x128xf32> to vector<18x128xf32>
    %20 = arith.addf %17, %19 : vector<18x128xf32>
    %cst_14 = arith.constant 5.000000e-01 : f32
    %21 = vector.broadcast %cst_14 : f32 to vector<18x128xf32>
    %22 = arith.mulf %21, %20 : vector<18x128xf32>
    %cst_15 = arith.constant 0.707106769 : f32
    %23 = vector.broadcast %cst_15 : f32 to vector<18x128xf32>
    %24 = arith.mulf %20, %23 : vector<18x128xf32>
    %25 = math.erf %24 : vector<18x128xf32>
    %cst_16 = arith.constant 1.000000e+00 : f32
    %26 = vector.broadcast %cst_16 : f32 to vector<18x128xf32>
    %27 = arith.addf %26, %25 : vector<18x128xf32>
    %28 = arith.mulf %22, %27 : vector<18x128xf32>
    %29 = tpu.iota {dimensions = array<i32: 0>} : vector<18x1xi32>
    %c1_i32 = arith.constant 1 : i32
    %30 = vector.broadcast %c1_i32 : i32 to vector<18x1xi32>
    %31 = arith.cmpi sge, %29, %30 : vector<18x1xi32>
    %c16_i32 = arith.constant 16 : i32
    %32 = vector.broadcast %c16_i32 : i32 to vector<18x1xi32>
    %33 = arith.cmpi sle, %29, %32 : vector<18x1xi32>
    %34 = arith.andi %31, %33 : vector<18x1xi1>
    %cst_17 = arith.constant 0.000000e+00 : f32
    %35 = vector.shape_cast %34 : vector<18x1xi1> to vector<18x1xi1>
    %36 = vector.broadcast %35 : vector<18x1xi1> to vector<18x128xi1>
    %37 = vector.broadcast %cst_17 : f32 to vector<18x128xf32>
    %38 = arith.select %36, %28, %37 : vector<18x128xi1>, vector<18x128xf32>
    %39 = arith.truncf %38 : vector<18x128xf32> to vector<18x128xbf16>
    %cst_18 = arith.constant 0.000000e+00 : f32
    %40 = vector.broadcast %cst_18 : f32 to vector<16x128xf32>
    %41 = vector.extract_strided_slice %39 {offsets = [0, 0], sizes = [16, 128], strides = [1, 1]} : vector<18x128xbf16> to vector<16x128xbf16>
    %c0_19 = arith.constant 0 : index
    %c0_20 = arith.constant 0 : index
    %c0_21 = arith.constant 0 : index
    %42 = vector.load %arg4[%c0_19, %c0_20, %c0_21] : memref<3x128x128xbf16, #tpu.memory_space<vmem>>, vector<1x128x128xbf16>
    %43 = vector.shape_cast %42 : vector<1x128x128xbf16> to vector<128x128xbf16>
    %cst_22 = arith.constant dense<0.000000e+00> : vector<16x128xf32>
    %44 = tpu.matmul %41, %43, %cst_22 {dimension_numbers = #tpu.dot_dimension_numbers<[1], [0], [0], [1], [0, 0, 1, 1], [], []>} : vector<16x128xbf16>, vector<128x128xbf16>, vector<16x128xf32> -> vector<16x128xf32>
    %45 = arith.addf %40, %44 : vector<16x128xf32>
    %46 = vector.extract_strided_slice %39 {offsets = [1, 0], sizes = [16, 128], strides = [1, 1]} : vector<18x128xbf16> to vector<16x128xbf16>
    %c1_23 = arith.constant 1 : index
    %c0_24 = arith.constant 0 : index
    %c0_25 = arith.constant 0 : index
    %47 = vector.load %arg4[%c1_23, %c0_24, %c0_25] : memref<3x128x128xbf16, #tpu.memory_space<vmem>>, vector<1x128x128xbf16>
    %48 = vector.shape_cast %47 : vector<1x128x128xbf16> to vector<128x128xbf16>
    %cst_26 = arith.constant dense<0.000000e+00> : vector<16x128xf32>
    %49 = tpu.matmul %46, %48, %cst_26 {dimension_numbers = #tpu.dot_dimension_numbers<[1], [0], [0], [1], [0, 0, 1, 1], [], []>} : vector<16x128xbf16>, vector<128x128xbf16>, vector<16x128xf32> -> vector<16x128xf32>
    %50 = arith.addf %45, %49 : vector<16x128xf32>
    %51 = vector.extract_strided_slice %39 {offsets = [2, 0], sizes = [16, 128], strides = [1, 1]} : vector<18x128xbf16> to vector<16x128xbf16>
    %c2_27 = arith.constant 2 : index
    %c0_28 = arith.constant 0 : index
    %c0_29 = arith.constant 0 : index
    %52 = vector.load %arg4[%c2_27, %c0_28, %c0_29] : memref<3x128x128xbf16, #tpu.memory_space<vmem>>, vector<1x128x128xbf16>
    %53 = vector.shape_cast %52 : vector<1x128x128xbf16> to vector<128x128xbf16>
    %cst_30 = arith.constant dense<0.000000e+00> : vector<16x128xf32>
    %54 = tpu.matmul %51, %53, %cst_30 {dimension_numbers = #tpu.dot_dimension_numbers<[1], [0], [0], [1], [0, 0, 1, 1], [], []>} : vector<16x128xbf16>, vector<128x128xbf16>, vector<16x128xf32> -> vector<16x128xf32>
    %55 = arith.addf %50, %54 : vector<16x128xf32>
    %c0_31 = arith.constant 0 : index
    %c0_32 = arith.constant 0 : index
    %56 = vector.load %arg5[%c0_31, %c0_32] : memref<1x128xf32, #tpu.memory_space<vmem>>, vector<1x128xf32>
    %57 = vector.broadcast %56 : vector<1x128xf32> to vector<16x128xf32>
    %58 = arith.addf %55, %57 : vector<16x128xf32>
    %59 = arith.truncf %58 : vector<16x128xf32> to vector<16x128xbf16>
    %c0_33 = arith.constant 0 : index
    %c0_34 = arith.constant 0 : index
    %c0_35 = arith.constant 0 : index
    %60 = vector.load %arg6[%c0_33, %c0_34, %c0_35] : memref<1x16x128xbf16, #tpu.memory_space<vmem>>, vector<1x16x128xbf16>
    %61 = vector.shape_cast %60 : vector<1x16x128xbf16> to vector<16x128xbf16>
    %62 = vector.shape_cast %59 : vector<16x128xbf16> to vector<1x16x128xbf16>
    tpu.vector_store %arg6[%c0_33, %c0_34, %c0_35], %62 {strides = array<i32>} : memref<1x16x128xbf16, #tpu.memory_space<vmem>>, vector<1x16x128xbf16>,
    return
  }
  func.func @transform_0(%arg0: i32) -> (i32, i32, i32) {
    %c0_i32 = arith.constant 0 : i32
    %c0_i32_0 = arith.constant 0 : i32
    %c0_i32_1 = arith.constant 0 : i32
    return %arg0, %c0_i32, %c0_i32_0 : i32, i32, i32
  }
  func.func @transform_1(%arg0: i32) -> (i32, i32, i32) {
    %c0_i32 = arith.constant 0 : i32
    %c0_i32_0 = arith.constant 0 : i32
    %c0_i32_1 = arith.constant 0 : i32
    %c0_i32_2 = arith.constant 0 : i32
    return %c0_i32, %c0_i32_0, %c0_i32_1 : i32, i32, i32
  }
  func.func @transform_2(%arg0: i32) -> (i32, i32) {
    %c0_i32 = arith.constant 0 : i32
    %c0_i32_0 = arith.constant 0 : i32
    %c0_i32_1 = arith.constant 0 : i32
    return %c0_i32, %c0_i32_0 : i32, i32
  }
  func.func @transform_3(%arg0: i32) -> (i32, i32, i32) {
    %c0_i32 = arith.constant 0 : i32
    %c0_i32_0 = arith.constant 0 : i32
    %c0_i32_1 = arith.constant 0 : i32
    %c0_i32_2 = arith.constant 0 : i32
    return %c0_i32, %c0_i32_0, %c0_i32_1 : i32, i32, i32
  }
  func.func @transform_4(%arg0: i32) -> (i32, i32) {
    %c0_i32 = arith.constant 0 : i32
    %c0_i32_0 = arith.constant 0 : i32
    %c0_i32_1 = arith.constant 0 : i32
    return %c0_i32, %c0_i32_0 : i32, i32
  }
  func.func @transform_5(%arg0: i32) -> (i32, i32, i32) {
    %c0_i32 = arith.constant 0 : i32
    %c0_i32_0 = arith.constant 0 : i32
    %c0_i32_1 = arith.constant 0 : i32
    return %arg0, %c0_i32, %c0_i32_0 : i32, i32, i32
  }
}

module attributes {stable_mosaic.version = 11 : i64} {
  func.func @_tail_kernel(%arg0: i32, %arg1: memref<1x18x128xbf16, #tpu.memory_space<vmem>>, %arg2: memref<3x128x128xbf16, #tpu.memory_space<vmem>>, %arg3: memref<1x16x128xf32, #tpu.memory_space<vmem>>) attributes {dimension_semantics = [#tpu.dimension_semantics<parallel>], iteration_bounds = array<i64: 2>, scalar_prefetch = 0 : i64, scratch_operands = 0 : i64, tpu.core_type = #tpu.core_type<tc>, window_params = [{transform_indices = @transform_0, window_bounds = array<i64: 1, 18, 128>}, {pipeline_mode = #tpu.pipeline_mode<synchronous>, transform_indices = @transform_1, window_bounds = array<i64: 3, 128, 128>}, {transform_indices = @transform_2, window_bounds = array<i64: 1, 16, 128>}]} {
    %c0 = arith.constant 0 : index
    %c0_0 = arith.constant 0 : index
    %c0_1 = arith.constant 0 : index
    %0 = vector.load %arg1[%c0, %c0_0, %c0_1] : memref<1x18x128xbf16, #tpu.memory_space<vmem>>, vector<1x18x128xbf16>
    %1 = vector.shape_cast %0 : vector<1x18x128xbf16> to vector<18x128xbf16>
    %cst = arith.constant 0.000000e+00 : f32
    %2 = vector.broadcast %cst : f32 to vector<16x128xf32>
    %3 = vector.extract_strided_slice %1 {offsets = [0, 0], sizes = [16, 128], strides = [1, 1]} : vector<18x128xbf16> to vector<16x128xbf16>
    %c0_2 = arith.constant 0 : index
    %c0_3 = arith.constant 0 : index
    %c0_4 = arith.constant 0 : index
    %4 = vector.load %arg2[%c0_2, %c0_3, %c0_4] : memref<3x128x128xbf16, #tpu.memory_space<vmem>>, vector<1x128x128xbf16>
    %5 = vector.shape_cast %4 : vector<1x128x128xbf16> to vector<128x128xbf16>
    %cst_5 = arith.constant dense<0.000000e+00> : vector<16x128xf32>
    %6 = tpu.matmul %3, %5, %cst_5 {dimension_numbers = #tpu.dot_dimension_numbers<[1], [0], [0], [1], [0, 0, 1, 1], [], []>} : vector<16x128xbf16>, vector<128x128xbf16>, vector<16x128xf32> -> vector<16x128xf32>
    %7 = arith.addf %2, %6 : vector<16x128xf32>
    %8 = vector.extract_strided_slice %1 {offsets = [1, 0], sizes = [16, 128], strides = [1, 1]} : vector<18x128xbf16> to vector<16x128xbf16>
    %c1 = arith.constant 1 : index
    %c0_6 = arith.constant 0 : index
    %c0_7 = arith.constant 0 : index
    %9 = vector.load %arg2[%c1, %c0_6, %c0_7] : memref<3x128x128xbf16, #tpu.memory_space<vmem>>, vector<1x128x128xbf16>
    %10 = vector.shape_cast %9 : vector<1x128x128xbf16> to vector<128x128xbf16>
    %cst_8 = arith.constant dense<0.000000e+00> : vector<16x128xf32>
    %11 = tpu.matmul %8, %10, %cst_8 {dimension_numbers = #tpu.dot_dimension_numbers<[1], [0], [0], [1], [0, 0, 1, 1], [], []>} : vector<16x128xbf16>, vector<128x128xbf16>, vector<16x128xf32> -> vector<16x128xf32>
    %12 = arith.addf %7, %11 : vector<16x128xf32>
    %13 = vector.extract_strided_slice %1 {offsets = [2, 0], sizes = [16, 128], strides = [1, 1]} : vector<18x128xbf16> to vector<16x128xbf16>
    %c2 = arith.constant 2 : index
    %c0_9 = arith.constant 0 : index
    %c0_10 = arith.constant 0 : index
    %14 = vector.load %arg2[%c2, %c0_9, %c0_10] : memref<3x128x128xbf16, #tpu.memory_space<vmem>>, vector<1x128x128xbf16>
    %15 = vector.shape_cast %14 : vector<1x128x128xbf16> to vector<128x128xbf16>
    %cst_11 = arith.constant dense<0.000000e+00> : vector<16x128xf32>
    %16 = tpu.matmul %13, %15, %cst_11 {dimension_numbers = #tpu.dot_dimension_numbers<[1], [0], [0], [1], [0, 0, 1, 1], [], []>} : vector<16x128xbf16>, vector<128x128xbf16>, vector<16x128xf32> -> vector<16x128xf32>
    %17 = arith.addf %12, %16 : vector<16x128xf32>
    %c0_12 = arith.constant 0 : index
    %c0_13 = arith.constant 0 : index
    %c0_14 = arith.constant 0 : index
    %18 = vector.load %arg3[%c0_12, %c0_13, %c0_14] : memref<1x16x128xf32, #tpu.memory_space<vmem>>, vector<1x16x128xf32>
    %19 = vector.shape_cast %18 : vector<1x16x128xf32> to vector<16x128xf32>
    %20 = vector.shape_cast %17 : vector<16x128xf32> to vector<1x16x128xf32>
    tpu.vector_store %arg3[%c0_12, %c0_13, %c0_14], %20 {strides = array<i32>} : memref<1x16x128xf32, #tpu.memory_space<vmem>>, vector<1x16x128xf32>,
    return
  }
  func.func @transform_0(%arg0: i32) -> (i32, i32, i32) {
    %c0_i32 = arith.constant 0 : i32
    %c0_i32_0 = arith.constant 0 : i32
    %c0_i32_1 = arith.constant 0 : i32
    return %arg0, %c0_i32, %c0_i32_0 : i32, i32, i32
  }
  func.func @transform_1(%arg0: i32) -> (i32, i32, i32) {
    %c0_i32 = arith.constant 0 : i32
    %c0_i32_0 = arith.constant 0 : i32
    %c0_i32_1 = arith.constant 0 : i32
    %c0_i32_2 = arith.constant 0 : i32
    return %c0_i32, %c0_i32_0, %c0_i32_1 : i32, i32, i32
  }
  func.func @transform_2(%arg0: i32) -> (i32, i32, i32) {
    %c0_i32 = arith.constant 0 : i32
    %c0_i32_0 = arith.constant 0 : i32
    %c0_i32_1 = arith.constant 0 : i32
    return %arg0, %c0_i32, %c0_i32_0 : i32, i32, i32
  }
}

module attributes {stable_mosaic.version = 11 : i64} {
  func.func @_convnext_stack_kernel(%arg0: i32, %arg1: i32, %arg2: memref<1x16x128xbf16, #tpu.memory_space<vmem>>, %arg3: memref<1x12x128xf32, #tpu.memory_space<vmem>>, %arg4: memref<1x1x256xf32, #tpu.memory_space<vmem>>, %arg5: memref<3x128x256xbf16, #tpu.memory_space<vmem>>, %arg6: memref<3x256x128xbf16, #tpu.memory_space<vmem>>, %arg7: memref<1x16x128xbf16, #tpu.memory_space<vmem>>, %arg8: memref<28x128xf32, #tpu.memory_space<vmem>>) attributes {dimension_semantics = [#tpu.dimension_semantics<parallel>, #tpu.dimension_semantics<arbitrary>], iteration_bounds = array<i64: 2, 3>, scalar_prefetch = 0 : i64, scratch_operands = 1 : i64, tpu.core_type = #tpu.core_type<tc>, window_params = [{transform_indices = @transform_0, window_bounds = array<i64: 1, 16, 128>}, {transform_indices = @transform_1, window_bounds = array<i64: 1, 12, 128>}, {transform_indices = @transform_2, window_bounds = array<i64: 1, 1, 256>}, {pipeline_mode = #tpu.pipeline_mode<synchronous>, transform_indices = @transform_3, window_bounds = array<i64: 3, 128, 256>}, {pipeline_mode = #tpu.pipeline_mode<synchronous>, transform_indices = @transform_4, window_bounds = array<i64: 3, 256, 128>}, {transform_indices = @transform_5, window_bounds = array<i64: 1, 16, 128>}]} {
    %c0_i32 = arith.constant 0 : i32
    %0 = arith.cmpi eq, %arg1, %c0_i32 : i32
    %1 = arith.extui %0 : i1 to i32
    %c0_i32_0 = arith.constant 0 : i32
    %2 = arith.cmpi ne, %1, %c0_i32_0 : i32
    scf.if %2 {
      %cst_26 = arith.constant 0.000000e+00 : f32
      %107 = vector.broadcast %cst_26 : f32 to vector<6x128xf32>
      %c0_27 = arith.constant 0 : index
      %c0_28 = arith.constant 0 : index
      %108 = vector.load %arg8[%c0_27, %c0_28] : memref<28x128xf32, #tpu.memory_space<vmem>>, vector<6x128xf32>
      tpu.vector_store %arg8[%c0_27, %c0_28], %107 {strides = array<i32>} : memref<28x128xf32, #tpu.memory_space<vmem>>, vector<6x128xf32>,
      %cst_29 = arith.constant 0.000000e+00 : f32
      %109 = vector.broadcast %cst_29 : f32 to vector<6x128xf32>
      %c22 = arith.constant 22 : index
      %c0_30 = arith.constant 0 : index
      %110 = vector.load %arg8[%c22, %c0_30] : memref<28x128xf32, #tpu.memory_space<vmem>>, vector<6x128xf32>
      tpu.vector_store %arg8[%c22, %c0_30], %109 {strides = array<i32>} : memref<28x128xf32, #tpu.memory_space<vmem>>, vector<6x128xf32>,
      %c0_31 = arith.constant 0 : index
      %c0_32 = arith.constant 0 : index
      %c0_33 = arith.constant 0 : index
      %111 = vector.load %arg2[%c0_31, %c0_32, %c0_33] : memref<1x16x128xbf16, #tpu.memory_space<vmem>>, vector<1x16x128xbf16>
      %112 = vector.shape_cast %111 : vector<1x16x128xbf16> to vector<16x128xbf16>
      %113 = arith.extf %112 : vector<16x128xbf16> to vector<16x128xf32>
      %c6 = arith.constant 6 : index
      %c0_34 = arith.constant 0 : index
      %114 = vector.load %arg8[%c6, %c0_34] : memref<28x128xf32, #tpu.memory_space<vmem>>, vector<16x128xf32>
      tpu.vector_store %arg8[%c6, %c0_34], %113 {strides = array<i32>} : memref<28x128xf32, #tpu.memory_space<vmem>>, vector<16x128xf32>,
    } else {
    }
    %c0 = arith.constant 0 : index
    %c0_1 = arith.constant 0 : index
    %3 = vector.load %arg8[%c0, %c0_1] : memref<28x128xf32, #tpu.memory_space<vmem>>, vector<28x128xf32>
    %4 = vector.extract_strided_slice %3 {offsets = [6, 0], sizes = [16, 128], strides = [1, 1]} : vector<28x128xf32> to vector<16x128xf32>
    %c0_2 = arith.constant 0 : index
    %c0_3 = arith.constant 0 : index
    %c0_4 = arith.constant 0 : index
    %5 = vector.load %arg3[%c0_2, %c0_3, %c0_4] : memref<1x12x128xf32, #tpu.memory_space<vmem>>, vector<1x12x128xf32>
    %6 = vector.shape_cast %5 : vector<1x12x128xf32> to vector<12x128xf32>
    %7 = vector.extract_strided_slice %6 {offsets = [7, 0], sizes = [1, 128], strides = [1, 1]} : vector<12x128xf32> to vector<1x128xf32>
    %8 = vector.extract_strided_slice %6 {offsets = [8, 0], sizes = [1, 128], strides = [1, 1]} : vector<12x128xf32> to vector<1x128xf32>
    %9 = vector.extract_strided_slice %6 {offsets = [9, 0], sizes = [1, 128], strides = [1, 1]} : vector<12x128xf32> to vector<1x128xf32>
    %10 = vector.extract_strided_slice %6 {offsets = [10, 0], sizes = [1, 128], strides = [1, 1]} : vector<12x128xf32> to vector<1x128xf32>
    %11 = vector.extract_strided_slice %6 {offsets = [11, 0], sizes = [1, 128], strides = [1, 1]} : vector<12x128xf32> to vector<1x128xf32>
    %cst = arith.constant 0.000000e+00 : f32
    %12 = vector.broadcast %cst : f32 to vector<16x128xf32>
    %13 = vector.extract_strided_slice %3 {offsets = [0, 0], sizes = [16, 128], strides = [1, 1]} : vector<28x128xf32> to vector<16x128xf32>
    %14 = vector.extract_strided_slice %6 {offsets = [0, 0], sizes = [1, 128], strides = [1, 1]} : vector<12x128xf32> to vector<1x128xf32>
    %15 = vector.broadcast %14 : vector<1x128xf32> to vector<16x128xf32>
    %16 = arith.mulf %13, %15 : vector<16x128xf32>
    %17 = arith.addf %12, %16 : vector<16x128xf32>
    %18 = vector.extract_strided_slice %3 {offsets = [2, 0], sizes = [16, 128], strides = [1, 1]} : vector<28x128xf32> to vector<16x128xf32>
    %19 = vector.extract_strided_slice %6 {offsets = [1, 0], sizes = [1, 128], strides = [1, 1]} : vector<12x128xf32> to vector<1x128xf32>
    %20 = vector.broadcast %19 : vector<1x128xf32> to vector<16x128xf32>
    %21 = arith.mulf %18, %20 : vector<16x128xf32>
    %22 = arith.addf %17, %21 : vector<16x128xf32>
    %23 = vector.extract_strided_slice %3 {offsets = [4, 0], sizes = [16, 128], strides = [1, 1]} : vector<28x128xf32> to vector<16x128xf32>
    %24 = vector.extract_strided_slice %6 {offsets = [2, 0], sizes = [1, 128], strides = [1, 1]} : vector<12x128xf32> to vector<1x128xf32>
    %25 = vector.broadcast %24 : vector<1x128xf32> to vector<16x128xf32>
    %26 = arith.mulf %23, %25 : vector<16x128xf32>
    %27 = arith.addf %22, %26 : vector<16x128xf32>
    %28 = vector.extract_strided_slice %3 {offsets = [6, 0], sizes = [16, 128], strides = [1, 1]} : vector<28x128xf32> to vector<16x128xf32>
    %29 = vector.extract_strided_slice %6 {offsets = [3, 0], sizes = [1, 128], strides = [1, 1]} : vector<12x128xf32> to vector<1x128xf32>
    %30 = vector.broadcast %29 : vector<1x128xf32> to vector<16x128xf32>
    %31 = arith.mulf %28, %30 : vector<16x128xf32>
    %32 = arith.addf %27, %31 : vector<16x128xf32>
    %33 = vector.extract_strided_slice %3 {offsets = [8, 0], sizes = [16, 128], strides = [1, 1]} : vector<28x128xf32> to vector<16x128xf32>
    %34 = vector.extract_strided_slice %6 {offsets = [4, 0], sizes = [1, 128], strides = [1, 1]} : vector<12x128xf32> to vector<1x128xf32>
    %35 = vector.broadcast %34 : vector<1x128xf32> to vector<16x128xf32>
    %36 = arith.mulf %33, %35 : vector<16x128xf32>
    %37 = arith.addf %32, %36 : vector<16x128xf32>
    %38 = vector.extract_strided_slice %3 {offsets = [10, 0], sizes = [16, 128], strides = [1, 1]} : vector<28x128xf32> to vector<16x128xf32>
    %39 = vector.extract_strided_slice %6 {offsets = [5, 0], sizes = [1, 128], strides = [1, 1]} : vector<12x128xf32> to vector<1x128xf32>
    %40 = vector.broadcast %39 : vector<1x128xf32> to vector<16x128xf32>
    %41 = arith.mulf %38, %40 : vector<16x128xf32>
    %42 = arith.addf %37, %41 : vector<16x128xf32>
    %43 = vector.extract_strided_slice %3 {offsets = [12, 0], sizes = [16, 128], strides = [1, 1]} : vector<28x128xf32> to vector<16x128xf32>
    %44 = vector.extract_strided_slice %6 {offsets = [6, 0], sizes = [1, 128], strides = [1, 1]} : vector<12x128xf32> to vector<1x128xf32>
    %45 = vector.broadcast %44 : vector<1x128xf32> to vector<16x128xf32>
    %46 = arith.mulf %43, %45 : vector<16x128xf32>
    %47 = arith.addf %42, %46 : vector<16x128xf32>
    %48 = vector.broadcast %7 : vector<1x128xf32> to vector<16x128xf32>
    %49 = arith.addf %47, %48 : vector<16x128xf32>
    %cst_5 = arith.constant dense<0.000000e+00> : vector<16xf32>
    %50 = vector.multi_reduction <add>, %49, %cst_5 [1] : vector<16x128xf32> to vector<16xf32>
    %51 = vector.shape_cast %50 : vector<16xf32> to vector<16x1xf32>
    %cst_6 = arith.constant 1.562500e-02 : f32
    %52 = vector.broadcast %cst_6 : f32 to vector<16x1xf32>
    %53 = arith.mulf %51, %52 : vector<16x1xf32>
    %54 = vector.broadcast %53 : vector<16x1xf32> to vector<16x128xf32>
    %55 = arith.subf %49, %54 : vector<16x128xf32>
    %56 = arith.mulf %55, %55 : vector<16x128xf32>
    %cst_7 = arith.constant dense<0.000000e+00> : vector<16xf32>
    %57 = vector.multi_reduction <add>, %56, %cst_7 [1] : vector<16x128xf32> to vector<16xf32>
    %58 = vector.shape_cast %57 : vector<16xf32> to vector<16x1xf32>
    %cst_8 = arith.constant 6.400000e+01 : f32
    %59 = vector.broadcast %cst_8 : f32 to vector<16x1xf32>
    %60 = arith.mulf %59, %53 : vector<16x1xf32>
    %61 = arith.mulf %60, %53 : vector<16x1xf32>
    %62 = arith.subf %58, %61 : vector<16x1xf32>
    %cst_9 = arith.constant 1.562500e-02 : f32
    %63 = vector.broadcast %cst_9 : f32 to vector<16x1xf32>
    %64 = arith.mulf %62, %63 : vector<16x1xf32>
    %cst_10 = arith.constant 9.99999997E-7 : f32
    %65 = vector.broadcast %cst_10 : f32 to vector<16x1xf32>
    %66 = arith.addf %64, %65 : vector<16x1xf32>
    %67 = math.rsqrt %66 : vector<16x1xf32>
    %68 = vector.broadcast %67 : vector<16x1xf32> to vector<16x128xf32>
    %69 = arith.mulf %55, %68 : vector<16x128xf32>
    %70 = vector.broadcast %8 : vector<1x128xf32> to vector<16x128xf32>
    %71 = arith.mulf %69, %70 : vector<16x128xf32>
    %72 = vector.broadcast %9 : vector<1x128xf32> to vector<16x128xf32>
    %73 = arith.addf %71, %72 : vector<16x128xf32>
    %74 = arith.index_cast %arg1 : i32 to index
    %c0_11 = arith.constant 0 : index
    %c0_12 = arith.constant 0 : index
    %75 = vector.load %arg5[%74, %c0_11, %c0_12] : memref<3x128x256xbf16, #tpu.memory_space<vmem>>, vector<1x128x256xbf16>
    %76 = vector.shape_cast %75 : vector<1x128x256xbf16> to vector<128x256xbf16>
    %77 = arith.index_cast %arg1 : i32 to index
    %c0_13 = arith.constant 0 : index
    %c0_14 = arith.constant 0 : index
    %78 = vector.load %arg6[%77, %c0_13, %c0_14] : memref<3x256x128xbf16, #tpu.memory_space<vmem>>, vector<1x256x128xbf16>
    %79 = vector.shape_cast %78 : vector<1x256x128xbf16> to vector<256x128xbf16>
    %80 = arith.truncf %73 : vector<16x128xf32> to vector<16x128xbf16>
    %cst_15 = arith.constant dense<0.000000e+00> : vector<16x256xf32>
    %81 = tpu.matmul %80, %76, %cst_15 {dimension_numbers = #tpu.dot_dimension_numbers<[1], [0], [0], [1], [0, 0, 1, 1], [], []>} : vector<16x128xbf16>, vector<128x256xbf16>, vector<16x256xf32> -> vector<16x256xf32>
    %c0_16 = arith.constant 0 : index
    %c0_17 = arith.constant 0 : index
    %c0_18 = arith.constant 0 : index
    %82 = vector.load %arg4[%c0_16, %c0_17, %c0_18] : memref<1x1x256xf32, #tpu.memory_space<vmem>>, vector<1x1x256xf32>
    %83 = vector.shape_cast %82 : vector<1x1x256xf32> to vector<1x256xf32>
    %84 = vector.broadcast %83 : vector<1x256xf32> to vector<16x256xf32>
    %85 = arith.addf %81, %84 : vector<16x256xf32>
    %cst_19 = arith.constant 5.000000e-01 : f32
    %86 = vector.broadcast %cst_19 : f32 to vector<16x256xf32>
    %87 = arith.mulf %86, %85 : vector<16x256xf32>
    %cst_20 = arith.constant 0.707106769 : f32
    %88 = vector.broadcast %cst_20 : f32 to vector<16x256xf32>
    %89 = arith.mulf %85, %88 : vector<16x256xf32>
    %90 = math.erf %89 : vector<16x256xf32>
    %cst_21 = arith.constant 1.000000e+00 : f32
    %91 = vector.broadcast %cst_21 : f32 to vector<16x256xf32>
    %92 = arith.addf %91, %90 : vector<16x256xf32>
    %93 = arith.mulf %87, %92 : vector<16x256xf32>
    %94 = arith.truncf %93 : vector<16x256xf32> to vector<16x256xbf16>
    %cst_22 = arith.constant dense<0.000000e+00> : vector<16x128xf32>
    %95 = tpu.matmul %94, %79, %cst_22 {dimension_numbers = #tpu.dot_dimension_numbers<[1], [0], [0], [1], [0, 0, 1, 1], [], []>} : vector<16x256xbf16>, vector<256x128xbf16>, vector<16x128xf32> -> vector<16x128xf32>
    %96 = vector.broadcast %10 : vector<1x128xf32> to vector<16x128xf32>
    %97 = arith.addf %95, %96 : vector<16x128xf32>
    %98 = vector.broadcast %11 : vector<1x128xf32> to vector<16x128xf32>
    %99 = arith.mulf %97, %98 : vector<16x128xf32>
    %100 = arith.addf %4, %99 : vector<16x128xf32>
    %c2_i32 = arith.constant 2 : i32
    %101 = arith.cmpi slt, %arg1, %c2_i32 : i32
    %102 = arith.extui %101 : i1 to i32
    %c0_i32_23 = arith.constant 0 : i32
    %103 = arith.cmpi ne, %102, %c0_i32_23 : i32
    scf.if %103 {
      %c6 = arith.constant 6 : index
      %c0_26 = arith.constant 0 : index
      %107 = vector.load %arg8[%c6, %c0_26] : memref<28x128xf32, #tpu.memory_space<vmem>>, vector<16x128xf32>
      tpu.vector_store %arg8[%c6, %c0_26], %100 {strides = array<i32>} : memref<28x128xf32, #tpu.memory_space<vmem>>, vector<16x128xf32>,
    } else {
    }
    %c2_i32_24 = arith.constant 2 : i32
    %104 = arith.cmpi eq, %arg1, %c2_i32_24 : i32
    %105 = arith.extui %104 : i1 to i32
    %c0_i32_25 = arith.constant 0 : i32
    %106 = arith.cmpi ne, %105, %c0_i32_25 : i32
    scf.if %106 {
      %107 = arith.truncf %100 : vector<16x128xf32> to vector<16x128xbf16>
      %c0_26 = arith.constant 0 : index
      %c0_27 = arith.constant 0 : index
      %c0_28 = arith.constant 0 : index
      %108 = vector.load %arg7[%c0_26, %c0_27, %c0_28] : memref<1x16x128xbf16, #tpu.memory_space<vmem>>, vector<1x16x128xbf16>
      %109 = vector.shape_cast %108 : vector<1x16x128xbf16> to vector<16x128xbf16>
      %110 = vector.shape_cast %107 : vector<16x128xbf16> to vector<1x16x128xbf16>
      tpu.vector_store %arg7[%c0_26, %c0_27, %c0_28], %110 {strides = array<i32>} : memref<1x16x128xbf16, #tpu.memory_space<vmem>>, vector<1x16x128xbf16>,
    } else {
    }
    return
  }
  func.func @transform_0(%arg0: i32, %arg1: i32) -> (i32, i32, i32) {
    %c0_i32 = arith.constant 0 : i32
    %c0_i32_0 = arith.constant 0 : i32
    %c0_i32_1 = arith.constant 0 : i32
    return %arg0, %c0_i32, %c0_i32_0 : i32, i32, i32
  }
  func.func @transform_1(%arg0: i32, %arg1: i32) -> (i32, i32, i32) {
    %c0_i32 = arith.constant 0 : i32
    %c0_i32_0 = arith.constant 0 : i32
    %c0_i32_1 = arith.constant 0 : i32
    return %arg1, %c0_i32, %c0_i32_0 : i32, i32, i32
  }
  func.func @transform_2(%arg0: i32, %arg1: i32) -> (i32, i32, i32) {
    %c0_i32 = arith.constant 0 : i32
    %c0_i32_0 = arith.constant 0 : i32
    %c0_i32_1 = arith.constant 0 : i32
    return %arg1, %c0_i32, %c0_i32_0 : i32, i32, i32
  }
  func.func @transform_3(%arg0: i32, %arg1: i32) -> (i32, i32, i32) {
    %c0_i32 = arith.constant 0 : i32
    %c0_i32_0 = arith.constant 0 : i32
    %c0_i32_1 = arith.constant 0 : i32
    %c0_i32_2 = arith.constant 0 : i32
    return %c0_i32, %c0_i32_0, %c0_i32_1 : i32, i32, i32
  }
  func.func @transform_4(%arg0: i32, %arg1: i32) -> (i32, i32, i32) {
    %c0_i32 = arith.constant 0 : i32
    %c0_i32_0 = arith.constant 0 : i32
    %c0_i32_1 = arith.constant 0 : i32
    %c0_i32_2 = arith.constant 0 : i32
    return %c0_i32, %c0_i32_0, %c0_i32_1 : i32, i32, i32
  }
  func.func @transform_5(%arg0: i32, %arg1: i32) -> (i32, i32, i32) {
    %c0_i32 = arith.constant 0 : i32
    %c0_i32_0 = arith.constant 0 : i32
    %c0_i32_1 = arith.constant 0 : i32
    return %arg0, %c0_i32, %c0_i32_0 : i32, i32, i32
  }
}

</mosaic_0001>

<llo_original>
// kernel: dvae_decode.4
$region0: #{dvae_decode.4}
  #allocation0 [shape = 'u32[]', space=smem, size = 0x4, offset = 0x4, fixed_abs, tag = 'smem constant byte address 0x4 - core index']
  #allocation1 [shape = 'u32[144,128]{1,0:T(1,128)}', space=vmem, size = 0x12000, scoped, tag = 'internal scratch']
  #allocation2 [shape = 'f32[28,128]{1,0:T(8,128)}', space=vmem, size = 0x4000, scoped, tag = 'scratch operand']
  %s0 = inlined_call_operand.vmem [shape: bf16[2,16,128], index: 0, kind: input, shape index: {}]
  %s1 = inlined_call_operand.vmem [shape: f32[3,12,128], index: 1, kind: input, shape index: {}]
  %s2 = inlined_call_operand.vmem [shape: f32[3,1,256], index: 2, kind: input, shape index: {}]
  %s3 = inlined_call_operand.vmem [shape: bf16[3,128,256], index: 3, kind: input, shape index: {}]
  %s4 = inlined_call_operand.hbm [shape: bf16[3,256,128], index: 4, kind: input, shape index: {}]
  %s5 = inlined_call_operand.vmem [shape: bf16[2,16,128], index: 5, kind: output, shape index: {}]
  %s6 = sld [smem:[#allocation0]]
  $region69: #{dvae_decode.4} parent=0
    _
  %s8 = ssub.s32 1, %s6
  %s9 = scalar_select 0, %s8, %s6
  $region1: #{dvae_decode.4} parent=0
    #allocation3 [shape = 'u8[196608]{0}', space=vmem, size = 0x30000, scoped, tag = 'input window, operand 4, single buffered']
    #allocation4 [shape = 's32[2]{0}', space=sflag, size = 0x8, scoped, tag = 'scoped memory for dvae_decode.4']
    %10 = vsyncpa [#allocation4], 0
    loop: start=0, step=1, limit=8
    $region2: #{dvae_decode.4} parent=1 // loop_pre_header
      _
    $region3: #{dvae_decode.4} parent=1 // loop_header
      %s12 = sphi 0, %s16
      %p13 = scmp.ge.s32.totalorder %s12, 8
      %s19 = sphi 0, %s31
      %s20 = sphi 0, %s27
      %s21 = sphi 0, %s19
      %s22 = sphi 0, %s20
      %s23 = sphi 0, %s21
      %s24 = sphi 0, %s22
      %s34 = sphi 0, %s36
      %s37 = sphi 0, %s34
      %s38 = sphi 0, %s37
      %s54 = sphi 0, %s38
      %s60 = sphi 0, %s62
      %s63 = sphi 0, %s60
      %s64 = sphi 0, %s63
      %s80 = sphi 0, %s64
      %s86 = sphi 0, %s88
      %s89 = sphi 0, %s86
      %s90 = sphi 0, %s89
      %s106 = sphi 0, %s90
      %s110 = sphi 0, %s110
      %s112 = sphi 0, %s110
      %s113 = sphi 0, %s112
      %s127 = sphi 0, %s113
      %s131 = sphi 0, %s131
      %s133 = sphi 0, %s131
      %s134 = sphi 0, %s133
      %s148 = sphi 0, %s134
      %s154 = sphi 0, %s156
      %s157 = sphi 0, %s154
      %s158 = sphi 0, %s157
      %s174 = sphi 0, %s158
    $region4: #{dvae_decode.4} parent=1 // loop_header_branch
      %15 = sbr.rel (%p13) target = $region8
    $region5: #{dvae_decode.4} parent=1 // loop_body
      %s17 = ssub.s32 %s12, 1
      %s18 = ssub.s32 %s12, 2
      %s25 = sadd.s32 1, %s20
      %p26 = scmp.ge.s32.totalorder %s25, 3
      %s27 = scalar_select %p26, 0, %s25
      %s28 = sadd.s32 1, %s19
      %s29 = scalar_select %p26, %s28, %s19
      %p30 = scmp.ge.s32.totalorder %s29, 2
      %s31 = scalar_select %p30, 0, %s29
      %s32 = ssub.s32 %s19, %s31
      %p33 = scmp.eq.s32.totalorder %s32, 0
      %s35 = sadd.s32 %s34, 1
      %s36 = scalar_select %p33, %s34, %s35
      %p39 = pneg %p33
      %p40 = scmp.eq.s32.totalorder %s12, 5
      %p41 = por %p39, %p40
      %p42 = scmp.ne.s32.totalorder %s34, %s37
      %p43 = scmp.eq.s32.totalorder %s12, 0
      %p44 = por %p42, %p43
      %p45 = scmp.ne.s32.totalorder %s34, %s37
      %p46 = scmp.eq.s32.totalorder %s17, 5
      %p47 = por %p45, %p46
      %p48 = scmp.ne.s32.totalorder %s37, %s38
      %p49 = scmp.eq.s32.totalorder %s17, 0
      %p50 = por %p48, %p49
      %p51 = scmp.ne.s32.totalorder %s37, %s38
      %p52 = scmp.eq.s32.totalorder %s18, 5
      %p53 = por %p51, %p52
      %p55 = scmp.ne.s32.totalorder %s38, %s54
      %p56 = scmp.eq.s32.totalorder %s18, 0
      %p57 = por %p55, %p56
      %s58 = ssub.s32 %s20, %s27
      %p59 = scmp.eq.s32.totalorder %s58, 0
      %s61 = sadd.s32 %s60, 1
      %s62 = scalar_select %p59, %s60, %s61
      %p65 = pneg %p59
      %p66 = scmp.eq.s32.totalorder %s12, 5
      %p67 = por %p65, %p66
      %p68 = scmp.ne.s32.totalorder %s60, %s63
      %p69 = scmp.eq.s32.totalorder %s12, 0
      %p70 = por %p68, %p69
      %p71 = scmp.ne.s32.totalorder %s60, %s63
      %p72 = scmp.eq.s32.totalorder %s17, 5
      %p73 = por %p71, %p72
      %p74 = scmp.ne.s32.totalorder %s63, %s64
      %p75 = scmp.eq.s32.totalorder %s17, 0
      %p76 = por %p74, %p75
      %p77 = scmp.ne.s32.totalorder %s63, %s64
      %p78 = scmp.eq.s32.totalorder %s18, 5
      %p79 = por %p77, %p78
      %p81 = scmp.ne.s32.totalorder %s64, %s80
      %p82 = scmp.eq.s32.totalorder %s18, 0
      %p83 = por %p81, %p82
      %s84 = ssub.s32 %s20, %s27
      %p85 = scmp.eq.s32.totalorder %s84, 0
      %s87 = sadd.s32 %s86, 1
      %s88 = scalar_select %p85, %s86, %s87
      %p91 = pneg %p85
      %p92 = scmp.eq.s32.totalorder %s12, 5
      %p93 = por %p91, %p92
      %p94 = scmp.ne.s32.totalorder %s86, %s89
      %p95 = scmp.eq.s32.totalorder %s12, 0
      %p96 = por %p94, %p95
      %p97 = scmp.ne.s32.totalorder %s86, %s89
      %p98 = scmp.eq.s32.totalorder %s17, 5
      %p99 = por %p97, %p98
      %p100 = scmp.ne.s32.totalorder %s89, %s90
      %p101 = scmp.eq.s32.totalorder %s17, 0
      %p102 = por %p100, %p101
      %p103 = scmp.ne.s32.totalorder %s89, %s90
      %p104 = scmp.eq.s32.totalorder %s18, 5
      %p105 = por %p103, %p104
      %p107 = scmp.ne.s32.totalorder %s90, %s106
      %p108 = scmp.eq.s32.totalorder %s18, 0
      %p109 = por %p107, %p108
      %s111 = sadd.s32 %s110, 1
      %p114 = scmp.eq.s32.totalorder %s12, 5
      %p115 = scmp.ne.s32.totalorder %s110, %s112
      %p116 = scmp.eq.s32.totalorder %s12, 0
      %p117 = por %p115, %p116
      %p118 = scmp.ne.s32.totalorder %s110, %s112
      %p119 = scmp.eq.s32.totalorder %s17, 5
      %p120 = por %p118, %p119
      %p121 = scmp.ne.s32.totalorder %s112, %s113
      %p122 = scmp.eq.s32.totalorder %s17, 0
      %p123 = por %p121, %p122
      %p124 = scmp.ne.s32.totalorder %s112, %s113
      %p125 = scmp.eq.s32.totalorder %s18, 5
      %p126 = por %p124, %p125
      %p128 = scmp.ne.s32.totalorder %s113, %s127
      %p129 = scmp.eq.s32.totalorder %s18, 0
      %p130 = por %p128, %p129
      %s132 = sadd.s32 %s131, 1
      %p135 = scmp.eq.s32.totalorder %s12, 5
      %p136 = scmp.ne.s32.totalorder %s131, %s133
      %p137 = scmp.eq.s32.totalorder %s12, 0
      %p138 = por %p136, %p137
      %p139 = scmp.ne.s32.totalorder %s131, %s133
      %p140 = scmp.eq.s32.totalorder %s17, 5
      %p141 = por %p139, %p140
      %p142 = scmp.ne.s32.totalorder %s133, %s134
      %p143 = scmp.eq.s32.totalorder %s17, 0
      %p144 = por %p142, %p143
      %p145 = scmp.ne.s32.totalorder %s133, %s134
      %p146 = scmp.eq.s32.totalorder %s18, 5
      %p147 = por %p145, %p146
      %p149 = scmp.ne.s32.totalorder %s134, %s148
      %p150 = scmp.eq.s32.totalorder %s18, 0
      %p151 = por %p149, %p150
      %s152 = ssub.s32 %s19, %s31
      %p153 = scmp.eq.s32.totalorder %s152, 0
      %s155 = sadd.s32 %s154, 1
      %s156 = scalar_select %p153, %s154, %s155
      %p159 = pneg %p153
      %p160 = scmp.eq.s32.totalorder %s12, 5
      %p161 = por %p159, %p160
      %p162 = scmp.ne.s32.totalorder %s154, %s157
      %p163 = scmp.eq.s32.totalorder %s12, 0
      %p164 = por %p162, %p163
      %p165 = scmp.ne.s32.totalorder %s154, %s157
      %p166 = scmp.eq.s32.totalorder %s17, 5
      %p167 = por %p165, %p166
      %p168 = scmp.ne.s32.totalorder %s157, %s158
      %p169 = scmp.eq.s32.totalorder %s17, 0
      %p170 = por %p168, %p169
      %p171 = scmp.ne.s32.totalorder %s157, %s158
      %p172 = scmp.eq.s32.totalorder %s18, 5
      %p173 = por %p171, %p172
      %p175 = scmp.ne.s32.totalorder %s158, %s174
      %p176 = scmp.eq.s32.totalorder %s18, 0
      %p177 = por %p175, %p176
      %p178 = scmp.le.s32.totalorder 1, %s12
      %p179 = scmp.lt.s32.totalorder %s12, 7
      %p180 = pnand %p178, %p179
      %p181 = pneg %p180
      // Predicated region
      $region9: #{dvae_decode.4} parent=5 // pred_check
        _
      $region10: #{dvae_decode.4} parent=5 // pred_check_branch
        %183 = sbr.rel (%p180) target = $region12
      $region11: #{dvae_decode.4} parent=5 // pred_region
        %s184 = ssub.s32 %s12, 1
        // Predicated region
        $region13: #{dvae_decode.4} parent=11 // pred_check
          %p185 = pneg %p123
        $region14: #{dvae_decode.4} parent=11 // pred_check_branch
          %187 = sbr.rel (%p185) target = $region16
        $region15: #{dvae_decode.4} parent=11 // pred_region
          _
        $region16: #{dvae_decode.4} parent=11 // pred_fallthru
          _
        // Predicated region
        $region17: #{dvae_decode.4} parent=11 // pred_check
          %p188 = pneg %p144
        $region18: #{dvae_decode.4} parent=11 // pred_check_branch
          %190 = sbr.rel (%p188) target = $region20
        $region19: #{dvae_decode.4} parent=11 // pred_region
          %s192 = ssub.s32 6144, 6144
          %193 = vsyncadd [#allocation4], %s192
          %s194 = sshll.u32 [#allocation3], 4
          %s195 = int_to_ptr.vmem [resolvable:$true] %s194
          %200 = dma.hbm_to_vmem [thread:$0]  %s4, 6144, %s195, [#allocation4], 64, 64, 4
        $region20: #{dvae_decode.4} parent=11 // pred_fallthru
          _
      $region12: #{dvae_decode.4} parent=5 // pred_fallthru
        _
      %p201 = scmp.lt.s32.totalorder %s12, 6
      // Predicated region
      $region21: #{dvae_decode.4} parent=5 // pred_check
        %p202 = pneg %p201
      $region22: #{dvae_decode.4} parent=5 // pred_check_branch
        %204 = sbr.rel (%p202) target = $region24
      $region23: #{dvae_decode.4} parent=5 // pred_region
        // Predicated region
        $region25: #{dvae_decode.4} parent=23 // pred_check
          %p205 = pneg %p44
        $region26: #{dvae_decode.4} parent=23 // pred_check_branch
          %207 = sbr.rel (%p205) target = $region28
        $region27: #{dvae_decode.4} parent=23 // pred_region
          %p208 = scmp.lt.s32.totalorder %s19, 1
          %s209 = scalar_select %p208, %s19, 1
          %s210 = smul.addr %s209, 2
          %s211 = smul.addr %s210, 4
          %s212 = scalar_lea.vmem %s0, %s211
        $region28: #{dvae_decode.4} parent=23 // pred_fallthru
          _
        // Predicated region
        $region29: #{dvae_decode.4} parent=23 // pred_check
          %p213 = pneg %p70
        $region30: #{dvae_decode.4} parent=23 // pred_check_branch
          %215 = sbr.rel (%p213) target = $region32
        $region31: #{dvae_decode.4} parent=23 // pred_region
          %p216 = scmp.lt.s32.totalorder %s20, 2
          %s217 = scalar_select %p216, %s20, 2
          %s218 = smul.addr %s217, 2
          %s219 = smul.addr %s218, 8
          %s220 = scalar_lea.vmem %s1, %s219
        $region32: #{dvae_decode.4} parent=23 // pred_fallthru
          _
        // Predicated region
        $region33: #{dvae_decode.4} parent=23 // pred_check
          %p221 = pneg %p96
        $region34: #{dvae_decode.4} parent=23 // pred_check_branch
          %223 = sbr.rel (%p221) target = $region36
        $region35: #{dvae_decode.4} parent=23 // pred_region
          %p224 = scmp.lt.s32.totalorder %s20, 2
          %s225 = scalar_select %p224, %s20, 2
          %s226 = smul.addr %s225, 2
          %s227 = scalar_lea.vmem %s2, %s226
        $region36: #{dvae_decode.4} parent=23 // pred_fallthru
          _
      $region24: #{dvae_decode.4} parent=5 // pred_fallthru
        _
      %p228 = scmp.le.s32.totalorder 1, %s12
      %p229 = scmp.lt.s32.totalorder %s12, 7
      %p230 = pnand %p228, %p229
      %p231 = pneg %p230
      // Predicated region
      $region37: #{dvae_decode.4} parent=5 // pred_check
        _
      $region38: #{dvae_decode.4} parent=5 // pred_check_branch
        %233 = sbr.rel (%p230) target = $region40
      $region39: #{dvae_decode.4} parent=5 // pred_region
        %s234 = ssub.s32 %s12, 1
        // Predicated region
        $region41: #{dvae_decode.4} parent=39 // pred_check
          %p235 = pneg %p144
        $region42: #{dvae_decode.4} parent=39 // pred_check_branch
          %237 = sbr.rel (%p235) target = $region44
        $region43: #{dvae_decode.4} parent=39 // pred_region
          %238 = dma.done [#allocation4], 6144
        $region44: #{dvae_decode.4} parent=39 // pred_fallthru
          _
        %p239 = scmp.lt.s32.totalorder %s21, 1
        %s240 = scalar_select %p239, %s21, 1
        %s241 = smul.addr %s240, 2
        %s242 = smul.addr %s241, 4
        %s243 = scalar_lea.vmem %s0, %s242
        %p244 = pneg %p50
        %p245 = pneg %p47
        %p246 = scmp.lt.s32.totalorder %s22, 2
        %s247 = scalar_select %p246, %s22, 2
        %s248 = smul.addr %s247, 2
        %s249 = smul.addr %s248, 8
        %s250 = scalar_lea.vmem %s1, %s249
        %p251 = pneg %p76
        %p252 = pneg %p73
        %p253 = scmp.lt.s32.totalorder %s22, 2
        %s254 = scalar_select %p253, %s22, 2
        %s255 = smul.addr %s254, 2
        %s256 = scalar_lea.vmem %s2, %s255
        %p257 = pneg %p102
        %p258 = pneg %p99
        %p259 = pneg %p123
        %p260 = pneg %p120
        %p261 = pneg %p144
        %p262 = pneg %p141
        %p263 = pneg %p170
        %p264 = pneg %p167
        %p265 = scmp.lt.s32.totalorder %s21, 1
        %s266 = scalar_select %p265, %s21, 1
        %s267 = smul.addr %s266, 2
        %s268 = smul.addr %s267, 4
        %s269 = scalar_lea.vmem %s5, %s268
        %p270 = scmp.lt.s32.totalorder %s21, 1
        %s271 = scalar_select %p270, %s21, 1
        %s272 = smul.addr %s271, 2
        %s273 = smul.addr %s272, 4
        %s274 = scalar_lea.vmem %s0, %s273
        %p275 = scmp.lt.s32.totalorder %s22, 2
        %s276 = scalar_select %p275, %s22, 2
        %s277 = smul.addr %s276, 2
        %s278 = smul.addr %s277, 8
        %s279 = scalar_lea.vmem %s1, %s278
        %p280 = scmp.lt.s32.totalorder %s22, 2
        %s281 = scalar_select %p280, %s22, 2
        %s282 = smul.addr %s281, 2
        %s283 = scalar_lea.vmem %s2, %s282
        %p284 = scmp.lt.s32.totalorder %s21, 1
        %s285 = scalar_select %p284, %s21, 1
        %s286 = smul.addr %s285, 2
        %s287 = smul.addr %s286, 4
        %s288 = scalar_lea.vmem %s5, %s287
        %p290 = scmp.eq.s32.totalorder %s22, 0
        // Predicated region
        $region45: #{dvae_decode.4} parent=39 // pred_check
          %p291 = pneg %p290
        $region46: #{dvae_decode.4} parent=39 // pred_check_branch
          %293 = sbr.rel (%p291) target = $region48
        $region47: #{dvae_decode.4} parent=39 // pred_region
          %294 = vst [vmem:[#allocation2] sm:$0x3f] 0.0
          %295 = vst [vmem:[#allocation2 + $0x16] sm:$0x3f] 0.0
          %v296 = vld [vmem:[%s274] sm:$0xf]
          %v297 = vld [vmem:[%s274 + $0x4] sm:$0xf]
          %v298 = vunpack.c.l.bf16 %v296
          %v299 = vunpack.c.l.bf16 %v297
          %300 = vst [vmem:[#allocation2 + $0x6] sm:$0xff] %v298
          %301 = vst [vmem:[#allocation2 + $0xe] sm:$0xff] %v299
        $region48: #{dvae_decode.4} parent=39 // pred_fallthru
          _
        %v302 = vld [vmem:[#allocation2] sm:$0xff]
        %v303 = vld [vmem:[#allocation2 + $0x8] sm:$0xff]
        %v304 = vld [vmem:[#allocation2 + $0x10] sm:$0xff]
        %v305 = vld [vmem:[#allocation2 + $0x18] sm:$0xf]
        %v306 = vld [vmem:[%s279] sm:$0xff]
        %v307 = vld [vmem:[%s279 + $0x8] sm:$0xf]
        %v308 = vlaneseq
        %v309 = vshrl.u32 %v308, 7
        %v310 = vsub.s32 0, %v309
        %v311 = vrot.slane %v306, %v310
        %v312 = vmul.f32 %v302, %v311
        %v313 = vmul.f32 %v303, %v311
        %v314 = vadd.f32 %v312, 0.0
        %v315 = vadd.f32 %v313, 0.0
        %v316 = vlaneseq
        %v317 = vshrl.u32 %v316, 7
        %v318 = vsub.s32 1, %v317
        %v319 = vrot.slane %v306, %v318
        %v320 = vmul.f32 %v302, %v319
        %v321 = vmul.f32 %v303, %v319
        %v322 = vmul.f32 %v304, %v319
        %vm326 = vcmask 1045504
        %v327 = vrot.slane %v320, 2
        %v328 = vrot.slane %v321, 2
        %v329 = vsel %vm326, %v327, %v328
        %v330 = vrot.slane %v322, 2
        %v331 = vsel %vm326, %v328, %v330
        %v334 = vadd.f32 %v314, %v329
        %v335 = vadd.f32 %v315, %v331
        %v336 = vlaneseq
        %v337 = vshrl.u32 %v336, 7
        %v338 = vsub.s32 2, %v337
        %v339 = vrot.slane %v306, %v338
        %v340 = vmul.f32 %v302, %v339
        %v341 = vmul.f32 %v303, %v339
        %v342 = vmul.f32 %v304, %v339
        %vm346 = vcmask 1043456
        %v347 = vrot.slane %v340, 4
        %v348 = vrot.slane %v341, 4
        %v349 = vsel %vm346, %v347, %v348
        %v350 = vrot.slane %v342, 4
        %v351 = vsel %vm346, %v348, %v350
        %v354 = vadd.f32 %v334, %v349
        %v355 = vadd.f32 %v335, %v351
        %v356 = vlaneseq
        %v357 = vshrl.u32 %v356, 7
        %v358 = vsub.s32 3, %v357
        %v359 = vrot.slane %v306, %v358
        %v360 = vmul.f32 %v302, %v359
        %v361 = vmul.f32 %v303, %v359
        %v362 = vmul.f32 %v304, %v359
        %vm366 = vcmask 1041408
        %v367 = vrot.slane %v360, 6
        %v368 = vrot.slane %v361, 6
        %v369 = vsel %vm366, %v367, %v368
        %v370 = vrot.slane %v362, 6
        %v371 = vsel %vm366, %v368, %v370
        %v374 = vadd.f32 %v354, %v369
        %v375 = vadd.f32 %v355, %v371
        %v376 = vlaneseq
        %v377 = vshrl.u32 %v376, 7
        %v378 = vsub.s32 4, %v377
        %v379 = vrot.slane %v306, %v378
        %v380 = vmul.f32 %v303, %v379
        %v381 = vmul.f32 %v304, %v379
        %v382 = vadd.f32 %v374, %v380
        %v383 = vadd.f32 %v375, %v381
        %v384 = vlaneseq
        %v385 = vshrl.u32 %v384, 7
        %v386 = vsub.s32 5, %v385
        %v387 = vrot.slane %v306, %v386
        %v388 = vmul.f32 %v303, %v387
        %v389 = vmul.f32 %v304, %v387
        %v390 = vmul.f32 %v305, %v387
        %v394 = vrot.slane %v388, 2
        %v395 = vrot.slane %v389, 2
        %v396 = vsel %vm326, %v394, %v395
        %v397 = vrot.slane %v390, 2
        %v398 = vsel %vm326, %v395, %v397
        %v401 = vadd.f32 %v382, %v396
        %v402 = vadd.f32 %v383, %v398
        %v403 = vlaneseq
        %v404 = vshrl.u32 %v403, 7
        %v405 = vsub.s32 6, %v404
        %v406 = vrot.slane %v306, %v405
        %v407 = vmul.f32 %v303, %v406
        %v408 = vmul.f32 %v304, %v406
        %v409 = vmul.f32 %v305, %v406
        %v413 = vrot.slane %v407, 4
        %v414 = vrot.slane %v408, 4
        %v415 = vsel %vm346, %v413, %v414
        %v416 = vrot.slane %v409, 4
        %v417 = vsel %vm346, %v414, %v416
        %v420 = vadd.f32 %v401, %v415
        %v421 = vadd.f32 %v402, %v417
        %v422 = vlaneseq
        %v423 = vshrl.u32 %v422, 7
        %v424 = vsub.s32 7, %v423
        %v425 = vrot.slane %v306, %v424
        %v426 = vadd.f32 %v420, %v425
        %v427 = vadd.f32 %v421, %v425
        %428 = vadd.xlane.f32.xlu0 %v426
        %v429 = vpop.xlane.xlu0 %428
        %430 = vadd.xlane.f32.xlu0 %v427
        %v431 = vpop.xlane.xlu0 %430
        %v432 = vmul.f32 %v429, 0.015625
        %v433 = vmul.f32 %v431, 0.015625
        %v434 = vsub.f32 %v426, %v432
        %v435 = vsub.f32 %v427, %v433
        %v436 = vmul.f32 %v434, %v434
        %v437 = vmul.f32 %v435, %v435
        %438 = vadd.xlane.f32.xlu0 %v436
        %v439 = vpop.xlane.xlu0 %438
        %440 = vadd.xlane.f32.xlu0 %v437
        %v441 = vpop.xlane.xlu0 %440
        %v442 = vmul.f32 %v432, 64.0
        %v443 = vmul.f32 %v433, 64.0
        %v444 = vmul.f32 %v442, %v432
        %v445 = vmul.f32 %v443, %v433
        %v446 = vsub.f32 %v439, %v444
        %v447 = vsub.f32 %v441, %v445
        %v448 = vmul.f32 %v446, 0.015625
        %v449 = vmul.f32 %v447, 0.015625
        %v450 = vadd.f32 %v448, 1e-06
        %v451 = vadd.f32 %v449, 1e-06
        %v452 = vrsqrt.pop %v450
        %v453 = vrsqrt.pop %v451
        %v454 = vmul.f32 %v434, %v452
        %v455 = vmul.f32 %v435, %v453
        %v456 = vlaneseq
        %v457 = vshrl.u32 %v456, 7
        %v458 = vsub.s32 0, %v457
        %v459 = vrot.slane %v307, %v458
        %v460 = vmul.f32 %v454, %v459
        %v461 = vmul.f32 %v455, %v459
        %v462 = vlaneseq
        %v463 = vshrl.u32 %v462, 7
        %v464 = vsub.s32 1, %v463
        %v465 = vrot.slane %v307, %v464
        %v466 = vadd.f32 %v460, %v465
        %v467 = vadd.f32 %v461, %v465
        %s468 = smul.u32 %s22, 32
        %s469 = smul.addr %s468, 4
        %s470 = scalar_lea.vmem %s3, %s469
        %v471 = vld [vmem:[%s470] sm:$0xff]
        %v472 = vld [vmem:[%s470 + $0x8] sm:$0xff]
        %v473 = vld [vmem:[%s470 + $0x10] sm:$0xff]
        %v474 = vld [vmem:[%s470 + $0x18] sm:$0xff]
        %v475 = vld [vmem:[%s470 + $0x20] sm:$0xff]
        %v476 = vld [vmem:[%s470 + $0x28] sm:$0xff]
        %v477 = vld [vmem:[%s470 + $0x30] sm:$0xff]
        %v478 = vld [vmem:[%s470 + $0x38] sm:$0xff]
        %v479 = vld [vmem:[%s470 + $0x40] sm:$0xff]
        %v480 = vld [vmem:[%s470 + $0x48] sm:$0xff]
        %v481 = vld [vmem:[%s470 + $0x50] sm:$0xff]
        %v482 = vld [vmem:[%s470 + $0x58] sm:$0xff]
        %v483 = vld [vmem:[%s470 + $0x60] sm:$0xff]
        %v484 = vld [vmem:[%s470 + $0x68] sm:$0xff]
        %v485 = vld [vmem:[%s470 + $0x70] sm:$0xff]
        %v486 = vld [vmem:[%s470 + $0x78] sm:$0xff]
        %s487 = smul.addr %s468, 4
        %s488 = scalar_lea.vmem [#allocation3], %s487
        %v489 = vld [vmem:[%s488] sm:$0xf]
        %v490 = vld [vmem:[%s488 + $0x4] sm:$0xf]
        %v491 = vld [vmem:[%s488 + $0x8] sm:$0xf]
        %v492 = vld [vmem:[%s488 + $0xc] sm:$0xf]
        %v493 = vld [vmem:[%s488 + $0x10] sm:$0xf]
        %v494 = vld [vmem:[%s488 + $0x14] sm:$0xf]
        %v495 = vld [vmem:[%s488 + $0x18] sm:$0xf]
        %v496 = vld [vmem:[%s488 + $0x1c] sm:$0xf]
        %v497 = vld [vmem:[%s488 + $0x20] sm:$0xf]
        %v498 = vld [vmem:[%s488 + $0x24] sm:$0xf]
        %v499 = vld [vmem:[%s488 + $0x28] sm:$0xf]
        %v500 = vld [vmem:[%s488 + $0x2c] sm:$0xf]
        %v501 = vld [vmem:[%s488 + $0x30] sm:$0xf]
        %v502 = vld [vmem:[%s488 + $0x34] sm:$0xf]
        %v503 = vld [vmem:[%s488 + $0x38] sm:$0xf]
        %v504 = vld [vmem:[%s488 + $0x3c] sm:$0xf]
        %v505 = vld [vmem:[%s488 + $0x40] sm:$0xf]
        %v506 = vld [vmem:[%s488 + $0x44] sm:$0xf]
        %v507 = vld [vmem:[%s488 + $0x48] sm:$0xf]
        %v508 = vld [vmem:[%s488 + $0x4c] sm:$0xf]
        %v509 = vld [vmem:[%s488 + $0x50] sm:$0xf]
        %v510 = vld [vmem:[%s488 + $0x54] sm:$0xf]
        %v511 = vld [vmem:[%s488 + $0x58] sm:$0xf]
        %v512 = vld [vmem:[%s488 + $0x5c] sm:$0xf]
        %v513 = vld [vmem:[%s488 + $0x60] sm:$0xf]
        %v514 = vld [vmem:[%s488 + $0x64] sm:$0xf]
        %v515 = vld [vmem:[%s488 + $0x68] sm:$0xf]
        %v516 = vld [vmem:[%s488 + $0x6c] sm:$0xf]
        %v517 = vld [vmem:[%s488 + $0x70] sm:$0xf]
        %v518 = vld [vmem:[%s488 + $0x74] sm:$0xf]
        %v519 = vld [vmem:[%s488 + $0x78] sm:$0xf]
        %v520 = vld [vmem:[%s488 + $0x7c] sm:$0xf]
        %v521 = vpack.c.bf16 %v467, %v466
        %v522 = vld [vmem:[%s283] sm:$0x3]
        %v524 = vlaneseq
        %v525 = vshrl.u32 %v524, 7
        %v526 = vsub.s32 0, %v525
        %v527 = vrot.slane %v522, %v526
        %v528 = vlaneseq
        %v529 = vshrl.u32 %v528, 7
        %v530 = vsub.s32 1, %v529
        %v531 = vrot.slane %v522, %v530
        %v550 = vunpack.c.l.b16 %v471
        %v551 = vunpack.c.h.b16 %v471
        %v552 = vunpack.c.l.b16 %v472
        %v553 = vunpack.c.h.b16 %v472
        %v554 = vunpack.c.l.b16 %v473
        %v555 = vunpack.c.h.b16 %v473
        %v556 = vunpack.c.l.b16 %v474
        %v557 = vunpack.c.h.b16 %v474
        %v558 = vunpack.c.l.b16 %v475
        %v559 = vunpack.c.h.b16 %v475
        %v560 = vunpack.c.l.b16 %v476
        %v561 = vunpack.c.h.b16 %v476
        %v562 = vunpack.c.l.b16 %v477
        %v563 = vunpack.c.h.b16 %v477
        %v564 = vunpack.c.l.b16 %v478
        %v565 = vunpack.c.h.b16 %v478
        %v566 = vunpack.c.l.b16 %v479
        %v567 = vunpack.c.h.b16 %v479
        %v568 = vunpack.c.l.b16 %v480
        %v569 = vunpack.c.h.b16 %v480
        %v570 = vunpack.c.l.b16 %v481
        %v571 = vunpack.c.h.b16 %v481
        %v572 = vunpack.c.l.b16 %v482
        %v573 = vunpack.c.h.b16 %v482
        %v574 = vunpack.c.l.b16 %v483
        %v575 = vunpack.c.h.b16 %v483
        %v576 = vunpack.c.l.b16 %v484
        %v577 = vunpack.c.h.b16 %v484
        %v578 = vunpack.c.l.b16 %v485
        %v579 = vunpack.c.h.b16 %v485
        %v580 = vunpack.c.l.b16 %v486
        %v581 = vunpack.c.h.b16 %v486
        %v582 = vpack.c.b16 %v552, %v550
        %v583 = vpack.c.b16 %v553, %v551
        %v584 = vpack.c.b16 %v556, %v554
        %v585 = vpack.c.b16 %v557, %v555
        %v586 = vpack.c.b16 %v560, %v558
        %v587 = vpack.c.b16 %v561, %v559
        %v588 = vpack.c.b16 %v564, %v562
        %v589 = vpack.c.b16 %v565, %v563
        %v590 = vpack.c.b16 %v568, %v566
        %v591 = vpack.c.b16 %v569, %v567
        %v592 = vpack.c.b16 %v572, %v570
        %v593 = vpack.c.b16 %v573, %v571
        %v594 = vpack.c.b16 %v576, %v574
        %v595 = vpack.c.b16 %v577, %v575
        %v596 = vpack.c.b16 %v580, %v578
        %v597 = vpack.c.b16 %v581, %v579
        %614 = vmatprep.subr.bf16.mxu0 %v597
        %615 = vmatpush1.bf16.msra.mxu0 %v596
        %616 = vmatprep.subr.bf16.mxu0 %v595
        %617 = vmatpush1.bf16.msra.mxu0 %v594
        %618 = vmatprep.subr.bf16.mxu0 %v593
        %619 = vmatpush1.bf16.msra.mxu0 %v592
        %620 = vmatprep.subr.bf16.mxu0 %v591
        %621 = vmatpush1.bf16.msra.mxu0 %v590
        %622 = vmatprep.subr.bf16.mxu0 %v589
        %623 = vmatpush1.bf16.msra.mxu0 %v588
        %624 = vmatprep.subr.bf16.mxu0 %v587
        %625 = vmatpush1.bf16.msra.mxu0 %v586
        %626 = vmatprep.subr.bf16.mxu0 %v585
        %627 = vmatpush1.bf16.msra.mxu0 %v584
        %628 = vmatprep.subr.bf16.mxu0 %v583
        %629 = vmatpush1.bf16.msra.mxu0 %v582
        %630 = vmatprep.subr.bf16.mxu0 0
        %631 = vmatpush2.bf16.msra.mxu0 0
        %632 = vmatprep.subr.bf16.mxu0 0
        %633 = vmatpush2.bf16.msra.mxu0 0
        %634 = vmatprep.subr.bf16.mxu0 0
        %635 = vmatpush2.bf16.msra.mxu0 0
        %636 = vmatprep.subr.bf16.mxu0 0
        %637 = vmatpush2.bf16.msra.mxu0 0
        %638 = vmatprep.subr.bf16.mxu0 0
        %639 = vmatpush2.bf16.msra.mxu0 0
        %640 = vmatprep.subr.bf16.mxu0 0
        %641 = vmatpush2.bf16.msra.mxu0 0
        %642 = vmatprep.subr.bf16.mxu0 0
        %643 = vmatpush2.bf16.msra.mxu0 0
        %644 = vmatprep.subr.bf16.mxu0 0
        %645 = vmatpush2.bf16.msra.mxu0 0
        %646 = vmatprep.mubr.bf16.mxu0 0
        %647 = vmatmul.mubr.bf16.gmra.mxu0 %v521
        %v648 = vpop.f32.mrf.mxu0
        %v649 = vadd.f32 %v527, %v648
        %v650 = vpop.f32.mrf.mxu0
        %v651 = vadd.f32 %v531, %v650
        %v652 = vpop.f32.mrf.mxu0
        %v653 = vadd.f32 %v527, %v652
        %v654 = vpop.f32.mrf.mxu0
        %v655 = vadd.f32 %v531, %v654
        %656 = vdwg.mxu0
        %v657 = vmul.f32 %v649, 0.5
        %v658 = vmul.f32 %v651, 0.5
        %v659 = vmul.f32 %v653, 0.5
        %v660 = vmul.f32 %v655, 0.5
        %v661 = vmul.f32 %v649, 0.70710677
        %v662 = vmul.f32 %v651, 0.70710677
        %v663 = vmul.f32 %v653, 0.70710677
        %v664 = vmul.f32 %v655, 0.70710677
        %v665 = verf.f32.pop %v661
        %v666 = verf.f32.pop %v662
        %v667 = verf.f32.pop %v663
        %v668 = verf.f32.pop %v664
        %v669 = vadd.f32 %v665, 1.0
        %v670 = vadd.f32 %v666, 1.0
        %v671 = vadd.f32 %v667, 1.0
        %v672 = vadd.f32 %v668, 1.0
        %v673 = vmul.f32 %v657, %v669
        %v674 = vmul.f32 %v658, %v670
        %v675 = vmul.f32 %v659, %v671
        %v676 = vmul.f32 %v660, %v672
        %v677 = vpack.c.bf16 %v675, %v673
        %v678 = vpack.c.bf16 %v676, %v674
        %v679 = vlaneseq
        %v680 = vshrl.u32 %v679, 7
        %v681 = vsub.s32 2, %v680
        %v682 = vrot.slane %v307, %v681
        %v715 = vunpack.c.l.b16 %v489
        %v716 = vunpack.c.l.b16 %v490
        %v717 = vunpack.c.l.b16 %v491
        %v718 = vunpack.c.l.b16 %v492
        %v719 = vunpack.c.l.b16 %v493
        %v720 = vunpack.c.l.b16 %v494
        %v721 = vunpack.c.l.b16 %v495
        %v722 = vunpack.c.l.b16 %v496
        %v723 = vunpack.c.l.b16 %v497
        %v724 = vunpack.c.l.b16 %v498
        %v725 = vunpack.c.l.b16 %v499
        %v726 = vunpack.c.l.b16 %v500
        %v727 = vunpack.c.l.b16 %v501
        %v728 = vunpack.c.l.b16 %v502
        %v729 = vunpack.c.l.b16 %v503
        %v730 = vunpack.c.l.b16 %v504
        %v731 = vunpack.c.l.b16 %v505
        %v732 = vunpack.c.l.b16 %v506
        %v733 = vunpack.c.l.b16 %v507
        %v734 = vunpack.c.l.b16 %v508
        %v735 = vunpack.c.l.b16 %v509
        %v736 = vunpack.c.l.b16 %v510
        %v737 = vunpack.c.l.b16 %v511
        %v738 = vunpack.c.l.b16 %v512
        %v739 = vunpack.c.l.b16 %v513
        %v740 = vunpack.c.l.b16 %v514
        %v741 = vunpack.c.l.b16 %v515
        %v742 = vunpack.c.l.b16 %v516
        %v743 = vunpack.c.l.b16 %v517
        %v744 = vunpack.c.l.b16 %v518
        %v745 = vunpack.c.l.b16 %v519
        %v746 = vunpack.c.l.b16 %v520
        %v747 = vpack.c.b16 %v716, %v715
        %v748 = vpack.c.b16 %v718, %v717
        %v749 = vpack.c.b16 %v720, %v719
        %v750 = vpack.c.b16 %v722, %v721
        %v751 = vpack.c.b16 %v724, %v723
        %v752 = vpack.c.b16 %v726, %v725
        %v753 = vpack.c.b16 %v728, %v727
        %v754 = vpack.c.b16 %v730, %v729
        %v755 = vpack.c.b16 %v732, %v731
        %v756 = vpack.c.b16 %v734, %v733
        %v757 = vpack.c.b16 %v736, %v735
        %v758 = vpack.c.b16 %v738, %v737
        %v759 = vpack.c.b16 %v740, %v739
        %v760 = vpack.c.b16 %v742, %v741
        %v761 = vpack.c.b16 %v744, %v743
        %v762 = vpack.c.b16 %v746, %v745
        %779 = vmatprep.subr.bf16.mxu0 0
        %780 = vmatpush1.bf16.msra.mxu0 %v754
        %781 = vmatprep.subr.bf16.mxu0 0
        %782 = vmatpush1.bf16.msra.mxu0 %v753
        %783 = vmatprep.subr.bf16.mxu0 0
        %784 = vmatpush1.bf16.msra.mxu0 %v752
        %785 = vmatprep.subr.bf16.mxu0 0
        %786 = vmatpush1.bf16.msra.mxu0 %v751
        %787 = vmatprep.subr.bf16.mxu0 0
        %788 = vmatpush1.bf16.msra.mxu0 %v750
        %789 = vmatprep.subr.bf16.mxu0 0
        %790 = vmatpush1.bf16.msra.mxu0 %v749
        %791 = vmatprep.subr.bf16.mxu0 0
        %792 = vmatpush1.bf16.msra.mxu0 %v748
        %793 = vmatprep.subr.bf16.mxu0 0
        %794 = vmatpush1.bf16.msra.mxu0 %v747
        %795 = vmatprep.subr.bf16.mxu0 0
        %796 = vmatpush2.bf16.msra.mxu0 %v762
        %797 = vmatprep.subr.bf16.mxu0 0
        %798 = vmatpush2.bf16.msra.mxu0 %v761
        %799 = vmatprep.subr.bf16.mxu0 0
        %800 = vmatpush2.bf16.msra.mxu0 %v760
        %801 = vmatprep.subr.bf16.mxu0 0
        %802 = vmatpush2.bf16.msra.mxu0 %v759
        %803 = vmatprep.subr.bf16.mxu0 0
        %804 = vmatpush2.bf16.msra.mxu0 %v758
        %805 = vmatprep.subr.bf16.mxu0 0
        %806 = vmatpush2.bf16.msra.mxu0 %v757
        %807 = vmatprep.subr.bf16.mxu0 0
        %808 = vmatpush2.bf16.msra.mxu0 %v756
        %809 = vmatprep.subr.bf16.mxu0 0
        %810 = vmatpush2.bf16.msra.mxu0 %v755
        %811 = vmatprep.mubr.bf16.mxu0 %v678
        %812 = vmatmul.mubr.bf16.gmra.mxu0 %v677
        %v813 = vpop.f32.mrf.mxu0
        %v814 = vadd.f32 %v682, %v813
        %v815 = vpop.f32.mrf.mxu0
        %v816 = vpop.f32.mrf.mxu0
        %v817 = vadd.f32 %v682, %v816
        %v818 = vpop.f32.mrf.mxu0
        %819 = vdwg.mxu0
        %v820 = vlaneseq
        %v821 = vshrl.u32 %v820, 7
        %v822 = vsub.s32 3, %v821
        %v823 = vrot.slane %v307, %v822
        %v824 = vmul.f32 %v814, %v823
        %v825 = vmul.f32 %v817, %v823
        %v828 = vrot.slane %v824, 2
        %v829 = vrot.slane %v825, 2
        %v830 = vsel %vm326, %v828, %v829
        %v834 = vadd.f32 %v302, %v828
        %v835 = vadd.f32 %v303, %v830
        %v836 = vadd.f32 %v304, %v829
        %p837 = scmp.lt.s32.totalorder %s22, 2
        // Predicated region
        $region49: #{dvae_decode.4} parent=39 // pred_check
          %p838 = pneg %p837
        $region50: #{dvae_decode.4} parent=39 // pred_check_branch
          %840 = sbr.rel (%p838) target = $region52
        $region51: #{dvae_decode.4} parent=39 // pred_region
          %841 = vst [vmem:[#allocation2] sm:$0xc0] %v834
          %842 = vst [vmem:[#allocation2 + $0x8] sm:$0xff] %v835
          %843 = vst [vmem:[#allocation2 + $0x10] sm:$0x3f] %v836
        $region52: #{dvae_decode.4} parent=39 // pred_fallthru
          _
        %p844 = scmp.eq.s32.totalorder %s22, 2
        // Predicated region
        $region53: #{dvae_decode.4} parent=39 // pred_check
          %p845 = pneg %p844
        $region54: #{dvae_decode.4} parent=39 // pred_check_branch
          %847 = sbr.rel (%p845) target = $region56
        $region55: #{dvae_decode.4} parent=39 // pred_region
          %v848 = vpack.c.bf16 %v835, %v834
          %v849 = vpack.c.bf16 %v836, %v836
          %v852 = vunpack.c.l.b16 %v848
          %v853 = vunpack.c.h.b16 %v848
          %v854 = vunpack.c.l.b16 %v849
          %v855 = vpack.c.b16 %v852, %v852
          %v856 = vpack.c.b16 %v853, %v853
          %v857 = vpack.c.b16 %v854, %v854
          %vm858 = vcmask 1040384
          %vm859 = vcmask 1044484
          %vm860 = vmor %vm858, %vm859
          %v861 = vrot.slane %v855, 7
          %v862 = vrot.slane %v861, 4
          %v863 = vrot.slane %v856, 7
          %v864 = vsel %vm860, %v862, %v863
          %v865 = vrot.slane %v863, 4
          %v866 = vrot.slane %v857, 7
          %v867 = vsel %vm860, %v865, %v866
          %870 = vst [vmem:[%s288] sm:$0xf] %v864
          %871 = vst [vmem:[%s288 + $0x4] sm:$0xf] %v867
        $region56: #{dvae_decode.4} parent=39 // pred_fallthru
          _
        %p872 = scmp.lt.s32.totalorder %s21, 1
        %s873 = scalar_select %p872, %s21, 1
        %s874 = smul.addr %s873, 2
        %s875 = smul.addr %s874, 4
        %s876 = scalar_lea.vmem %s5, %s875
        // Predicated region
        $region57: #{dvae_decode.4} parent=39 // pred_check
          %p877 = pneg %p167
        $region58: #{dvae_decode.4} parent=39 // pred_check_branch
          %879 = sbr.rel (%p877) target = $region60
        $region59: #{dvae_decode.4} parent=39 // pred_region
          _
        $region60: #{dvae_decode.4} parent=39 // pred_fallthru
          _
      $region40: #{dvae_decode.4} parent=5 // pred_fallthru
        _
      %p880 = scmp.le.s32.totalorder 2, %s12
      // Predicated region
      $region61: #{dvae_decode.4} parent=5 // pred_check
        %p881 = pneg %p880
      $region62: #{dvae_decode.4} parent=5 // pred_check_branch
        %883 = sbr.rel (%p881) target = $region64
      $region63: #{dvae_decode.4} parent=5 // pred_region
        %s884 = ssub.s32 %s12, 2
        // Predicated region
        $region65: #{dvae_decode.4} parent=63 // pred_check
          %p885 = pneg %p173
        $region66: #{dvae_decode.4} parent=63 // pred_check_branch
          %887 = sbr.rel (%p885) target = $region68
        $region67: #{dvae_decode.4} parent=63 // pred_region
          %p888 = scmp.lt.s32.totalorder %s23, 1
          %s889 = scalar_select %p888, %s23, 1
          %s890 = smul.addr %s889, 2
          %s891 = smul.addr %s890, 4
          %s892 = scalar_lea.vmem %s5, %s891
        $region68: #{dvae_decode.4} parent=63 // pred_fallthru
          _
      $region64: #{dvae_decode.4} parent=5 // pred_fallthru
        _
    $region6: #{dvae_decode.4} parent=1 // loop_footer
      %s16 = sadd.s32 1, %s12
    $region7: #{dvae_decode.4} parent=1 // loop_footer_branch
      %11 = sbr.rel target = $region3
    $region8: #{dvae_decode.4} parent=1 // loop_exit
      _
    %893 = vsyncpa [#allocation4], 1
    %s894 = scalar_lea.sflag [#allocation4], 1
    %895 = vsyncpa %s894, 1

// kernel: dvae_decode.5
$region0: #{dvae_decode.5}
  #allocation0 [shape = 'u32[]', space=smem, size = 0x4, offset = 0x4, fixed_abs, tag = 'smem constant byte address 0x4 - core index']
  #allocation1 [shape = 'u32[144,128]{1,0:T(1,128)}', space=vmem, size = 0x12000, scoped, tag = 'internal scratch']
  %s0 = inlined_call_operand.vmem [shape: bf16[2,18,128], index: 0, kind: input, shape index: {}]
  %s1 = inlined_call_operand.vmem [shape: bf16[3,128,128], index: 1, kind: input, shape index: {}]
  %s2 = inlined_call_operand.vmem [shape: f32[2,16,128], index: 2, kind: output, shape index: {}]
  %s3 = sld [smem:[#allocation0]]
  $region41: #{dvae_decode.5} parent=0
    _
  %s5 = ssub.s32 1, %s3
  %s6 = scalar_select 0, %s5, %s3
  loop: start=0, step=1, limit=4
  $region2: #{dvae_decode.5} parent=0 // loop_pre_header
    _
  $region3: #{dvae_decode.5} parent=0 // loop_header
    %s8 = sphi 0, %s12
    %p9 = scmp.ge.s32.totalorder %s8, 4
    %s18 = sphi 0, %s20
    %s21 = sphi 0, %s18
    %s22 = sphi 0, %s21
    %s38 = sphi 0, %s22
    %s42 = sphi 0, %s42
    %s44 = sphi 0, %s42
    %s45 = sphi 0, %s44
    %s59 = sphi 0, %s45
    %s65 = sphi 0, %s67
    %s68 = sphi 0, %s65
    %s69 = sphi 0, %s68
    %s85 = sphi 0, %s69
  $region4: #{dvae_decode.5} parent=0 // loop_header_branch
    %11 = sbr.rel (%p9) target = $region8
  $region5: #{dvae_decode.5} parent=0 // loop_body
    %s13 = ssub.s32 %s8, 1
    %s14 = ssub.s32 %s8, 2
    %s15 = sadd.s32 %s8, 1
    %s16 = ssub.s32 %s8, %s15
    %p17 = scmp.eq.s32.totalorder %s16, 0
    %s19 = sadd.s32 %s18, 1
    %s20 = scalar_select %p17, %s18, %s19
    %p23 = pneg %p17
    %p24 = scmp.eq.s32.totalorder %s8, 1
    %p25 = por %p23, %p24
    %p26 = scmp.ne.s32.totalorder %s18, %s21
    %p27 = scmp.eq.s32.totalorder %s8, 0
    %p28 = por %p26, %p27
    %p29 = scmp.ne.s32.totalorder %s18, %s21
    %p30 = scmp.eq.s32.totalorder %s13, 1
    %p31 = por %p29, %p30
    %p32 = scmp.ne.s32.totalorder %s21, %s22
    %p33 = scmp.eq.s32.totalorder %s13, 0
    %p34 = por %p32, %p33
    %p35 = scmp.ne.s32.totalorder %s21, %s22
    %p36 = scmp.eq.s32.totalorder %s14, 1
    %p37 = por %p35, %p36
    %p39 = scmp.ne.s32.totalorder %s22, %s38
    %p40 = scmp.eq.s32.totalorder %s14, 0
    %p41 = por %p39, %p40
    %s43 = sadd.s32 %s42, 1
    %p46 = scmp.eq.s32.totalorder %s8, 1
    %p47 = scmp.ne.s32.totalorder %s42, %s44
    %p48 = scmp.eq.s32.totalorder %s8, 0
    %p49 = por %p47, %p48
    %p50 = scmp.ne.s32.totalorder %s42, %s44
    %p51 = scmp.eq.s32.totalorder %s13, 1
    %p52 = por %p50, %p51
    %p53 = scmp.ne.s32.totalorder %s44, %s45
    %p54 = scmp.eq.s32.totalorder %s13, 0
    %p55 = por %p53, %p54
    %p56 = scmp.ne.s32.totalorder %s44, %s45
    %p57 = scmp.eq.s32.totalorder %s14, 1
    %p58 = por %p56, %p57
    %p60 = scmp.ne.s32.totalorder %s45, %s59
    %p61 = scmp.eq.s32.totalorder %s14, 0
    %p62 = por %p60, %p61
    %s63 = ssub.s32 %s8, %s15
    %p64 = scmp.eq.s32.totalorder %s63, 0
    %s66 = sadd.s32 %s65, 1
    %s67 = scalar_select %p64, %s65, %s66
    %p70 = pneg %p64
    %p71 = scmp.eq.s32.totalorder %s8, 1
    %p72 = por %p70, %p71
    %p73 = scmp.ne.s32.totalorder %s65, %s68
    %p74 = scmp.eq.s32.totalorder %s8, 0
    %p75 = por %p73, %p74
    %p76 = scmp.ne.s32.totalorder %s65, %s68
    %p77 = scmp.eq.s32.totalorder %s13, 1
    %p78 = por %p76, %p77
    %p79 = scmp.ne.s32.totalorder %s68, %s69
    %p80 = scmp.eq.s32.totalorder %s13, 0
    %p81 = por %p79, %p80
    %p82 = scmp.ne.s32.totalorder %s68, %s69
    %p83 = scmp.eq.s32.totalorder %s14, 1
    %p84 = por %p82, %p83
    %p86 = scmp.ne.s32.totalorder %s69, %s85
    %p87 = scmp.eq.s32.totalorder %s14, 0
    %p88 = por %p86, %p87
    %p89 = scmp.le.s32.totalorder 1, %s8
    %p90 = scmp.lt.s32.totalorder %s8, 3
    %p91 = pnand %p89, %p90
    %p92 = pneg %p91
    // Predicated region
    $region9: #{dvae_decode.5} parent=5 // pred_check
      _
    $region10: #{dvae_decode.5} parent=5 // pred_check_branch
      %94 = sbr.rel (%p91) target = $region12
    $region11: #{dvae_decode.5} parent=5 // pred_region
      %s95 = ssub.s32 %s8, 1
      // Predicated region
      $region13: #{dvae_decode.5} parent=11 // pred_check
        %p96 = pneg %p55
      $region14: #{dvae_decode.5} parent=11 // pred_check_branch
        %98 = sbr.rel (%p96) target = $region16
      $region15: #{dvae_decode.5} parent=11 // pred_region
        _
      $region16: #{dvae_decode.5} parent=11 // pred_fallthru
        _
    $region12: #{dvae_decode.5} parent=5 // pred_fallthru
      _
    %p99 = scmp.lt.s32.totalorder %s8, 2
    // Predicated region
    $region17: #{dvae_decode.5} parent=5 // pred_check
      %p100 = pneg %p99
    $region18: #{dvae_decode.5} parent=5 // pred_check_branch
      %102 = sbr.rel (%p100) target = $region20
    $region19: #{dvae_decode.5} parent=5 // pred_region
      // Predicated region
      $region21: #{dvae_decode.5} parent=19 // pred_check
        %p103 = pneg %p28
      $region22: #{dvae_decode.5} parent=19 // pred_check_branch
        %105 = sbr.rel (%p103) target = $region24
      $region23: #{dvae_decode.5} parent=19 // pred_region
        %p106 = scmp.lt.s32.totalorder %s8, 1
        %s107 = scalar_select %p106, %s8, 1
        %s108 = smul.addr %s107, 3
        %s109 = smul.addr %s108, 4
        %s110 = scalar_lea.vmem %s0, %s109
      $region24: #{dvae_decode.5} parent=19 // pred_fallthru
        _
    $region20: #{dvae_decode.5} parent=5 // pred_fallthru
      _
    %p111 = scmp.le.s32.totalorder 1, %s8
    %p112 = scmp.lt.s32.totalorder %s8, 3
    %p113 = pnand %p111, %p112
    %p114 = pneg %p113
    // Predicated region
    $region25: #{dvae_decode.5} parent=5 // pred_check
      _
    $region26: #{dvae_decode.5} parent=5 // pred_check_branch
      %116 = sbr.rel (%p113) target = $region28
    $region27: #{dvae_decode.5} parent=5 // pred_region
      %s117 = ssub.s32 %s8, 1
      %p118 = scmp.lt.s32.totalorder %s13, 1
      %s119 = scalar_select %p118, %s13, 1
      %s120 = smul.addr %s119, 3
      %s121 = smul.addr %s120, 4
      %s122 = scalar_lea.vmem %s0, %s121
      %p123 = pneg %p34
      %p124 = pneg %p31
      %p125 = pneg %p55
      %p126 = pneg %p52
      %p127 = pneg %p81
      %p128 = pneg %p78
      %p129 = scmp.lt.s32.totalorder %s13, 1
      %s130 = scalar_select %p129, %s13, 1
      %s131 = smul.addr %s130, 2
      %s132 = smul.addr %s131, 8
      %s133 = scalar_lea.vmem %s2, %s132
      %p134 = scmp.lt.s32.totalorder %s13, 1
      %s135 = scalar_select %p134, %s13, 1
      %s136 = smul.addr %s135, 3
      %s137 = smul.addr %s136, 4
      %s138 = scalar_lea.vmem %s0, %s137
      %p139 = scmp.lt.s32.totalorder %s13, 1
      %s140 = scalar_select %p139, %s13, 1
      %s141 = smul.addr %s140, 2
      %s142 = smul.addr %s141, 8
      %s143 = scalar_lea.vmem %s2, %s142
      %v145 = vld [vmem:[%s138] sm:$0xf]
      %v146 = vld [vmem:[%s138 + $0x4] sm:$0xf]
      %v147 = vld [vmem:[%s138 + $0x8] sm:$0x1]
      %v148 = vld [vmem:[%s1] sm:$0xf]
      %v149 = vld [vmem:[%s1 + $0x4] sm:$0xf]
      %v150 = vld [vmem:[%s1 + $0x8] sm:$0xf]
      %v151 = vld [vmem:[%s1 + $0xc] sm:$0xf]
      %v152 = vld [vmem:[%s1 + $0x10] sm:$0xf]
      %v153 = vld [vmem:[%s1 + $0x14] sm:$0xf]
      %v154 = vld [vmem:[%s1 + $0x18] sm:$0xf]
      %v155 = vld [vmem:[%s1 + $0x1c] sm:$0xf]
      %v156 = vld [vmem:[%s1 + $0x20] sm:$0xf]
      %v157 = vld [vmem:[%s1 + $0x24] sm:$0xf]
      %v158 = vld [vmem:[%s1 + $0x28] sm:$0xf]
      %v159 = vld [vmem:[%s1 + $0x2c] sm:$0xf]
      %v160 = vld [vmem:[%s1 + $0x30] sm:$0xf]
      %v161 = vld [vmem:[%s1 + $0x34] sm:$0xf]
      %v162 = vld [vmem:[%s1 + $0x38] sm:$0xf]
      %v163 = vld [vmem:[%s1 + $0x3c] sm:$0xf]
      %s164 = scalar_lea.vmem %s1, 64
      %v165 = vld [vmem:[%s164] sm:$0xf]
      %v166 = vld [vmem:[%s164 + $0x4] sm:$0xf]
      %v167 = vld [vmem:[%s164 + $0x8] sm:$0xf]
      %v168 = vld [vmem:[%s164 + $0xc] sm:$0xf]
      %v169 = vld [vmem:[%s164 + $0x10] sm:$0xf]
      %v170 = vld [vmem:[%s164 + $0x14] sm:$0xf]
      %v171 = vld [vmem:[%s164 + $0x18] sm:$0xf]
      %v172 = vld [vmem:[%s164 + $0x1c] sm:$0xf]
      %v173 = vld [vmem:[%s164 + $0x20] sm:$0xf]
      %v174 = vld [vmem:[%s164 + $0x24] sm:$0xf]
      %v175 = vld [vmem:[%s164 + $0x28] sm:$0xf]
      %v176 = vld [vmem:[%s164 + $0x2c] sm:$0xf]
      %v177 = vld [vmem:[%s164 + $0x30] sm:$0xf]
      %v178 = vld [vmem:[%s164 + $0x34] sm:$0xf]
      %v179 = vld [vmem:[%s164 + $0x38] sm:$0xf]
      %v180 = vld [vmem:[%s164 + $0x3c] sm:$0xf]
      %v184 = vunpack.c.l.b16 %v145
      %v185 = vunpack.c.l.b16 %v146
      %v186 = vunpack.c.l.b16 %v147
      %v187 = vpack.c.b16 %v185, %v184
      %v188 = vpack.c.b16 %v186, %v186
      %vm189 = vsmask.f32 7424
      %v191 = vshrl.u32 %v187, 16
      %v193 = vshll.u32 %v187, 16
      %v195 = vrot.slane %v193, 1
      %v196 = vor.u32 %v191, %v195
      %v198 = vshll.u32 %v188, 16
      %v200 = vrot.slane %v198, 1
      %v201 = vsel %vm189, %v196, %v200
      %v219 = vunpack.c.l.b16 %v165
      %v220 = vunpack.c.l.b16 %v166
      %v221 = vunpack.c.l.b16 %v167
      %v222 = vunpack.c.l.b16 %v168
      %v223 = vunpack.c.l.b16 %v169
      %v224 = vunpack.c.l.b16 %v170
      %v225 = vunpack.c.l.b16 %v171
      %v226 = vunpack.c.l.b16 %v172
      %v227 = vunpack.c.l.b16 %v173
      %v228 = vunpack.c.l.b16 %v174
      %v229 = vunpack.c.l.b16 %v175
      %v230 = vunpack.c.l.b16 %v176
      %v231 = vunpack.c.l.b16 %v177
      %v232 = vunpack.c.l.b16 %v178
      %v233 = vunpack.c.l.b16 %v179
      %v234 = vunpack.c.l.b16 %v180
      %v235 = vpack.c.b16 %v220, %v219
      %v236 = vpack.c.b16 %v222, %v221
      %v237 = vpack.c.b16 %v224, %v223
      %v238 = vpack.c.b16 %v226, %v225
      %v239 = vpack.c.b16 %v228, %v227
      %v240 = vpack.c.b16 %v230, %v229
      %v241 = vpack.c.b16 %v232, %v231
      %v242 = vpack.c.b16 %v234, %v233
      %251 = vmatprep.subr.bf16.mxu0 0
      %252 = vmatpush1.bf16.msra.mxu0 %v242
      %253 = vmatprep.subr.bf16.mxu0 0
      %254 = vmatpush1.bf16.msra.mxu0 %v241
      %255 = vmatprep.subr.bf16.mxu0 0
      %256 = vmatpush1.bf16.msra.mxu0 %v240
      %257 = vmatprep.subr.bf16.mxu0 0
      %258 = vmatpush1.bf16.msra.mxu0 %v239
      %259 = vmatprep.subr.bf16.mxu0 0
      %260 = vmatpush1.bf16.msra.mxu0 %v238
      %261 = vmatprep.subr.bf16.mxu0 0
      %262 = vmatpush1.bf16.msra.mxu0 %v237
      %263 = vmatprep.subr.bf16.mxu0 0
      %264 = vmatpush1.bf16.msra.mxu0 %v236
      %265 = vmatprep.subr.bf16.mxu0 0
      %266 = vmatpush1.bf16.msra.mxu0 %v235
      %267 = vmatprep.subr.bf16.mxu0 0
      %268 = vmatpush2.bf16.msra.mxu0 0
      %269 = vmatprep.subr.bf16.mxu0 0
      %270 = vmatpush2.bf16.msra.mxu0 0
      %271 = vmatprep.subr.bf16.mxu0 0
      %272 = vmatpush2.bf16.msra.mxu0 0
      %273 = vmatprep.subr.bf16.mxu0 0
      %274 = vmatpush2.bf16.msra.mxu0 0
      %275 = vmatprep.subr.bf16.mxu0 0
      %276 = vmatpush2.bf16.msra.mxu0 0
      %277 = vmatprep.subr.bf16.mxu0 0
      %278 = vmatpush2.bf16.msra.mxu0 0
      %279 = vmatprep.subr.bf16.mxu0 0
      %280 = vmatpush2.bf16.msra.mxu0 0
      %281 = vmatprep.subr.bf16.mxu0 0
      %282 = vmatpush2.bf16.msra.mxu0 0
      %283 = vmatprep.mubr.bf16.mxu0 0
      %284 = vmatmul.mubr.bf16.gmra.mxu0 %v201
      %v285 = vpop.f32.mrf.mxu0
      %v286 = vadd.f32 0.0, %v285
      %v287 = vpop.f32.mrf.mxu0
      %v288 = vpop.f32.mrf.mxu0
      %v289 = vadd.f32 0.0, %v288
      %v290 = vpop.f32.mrf.mxu0
      %291 = vdwg.mxu0
      %v309 = vunpack.c.l.b16 %v148
      %v310 = vunpack.c.l.b16 %v149
      %v311 = vunpack.c.l.b16 %v150
      %v312 = vunpack.c.l.b16 %v151
      %v313 = vunpack.c.l.b16 %v152
      %v314 = vunpack.c.l.b16 %v153
      %v315 = vunpack.c.l.b16 %v154
      %v316 = vunpack.c.l.b16 %v155
      %v317 = vunpack.c.l.b16 %v156
      %v318 = vunpack.c.l.b16 %v157
      %v319 = vunpack.c.l.b16 %v158
      %v320 = vunpack.c.l.b16 %v159
      %v321 = vunpack.c.l.b16 %v160
      %v322 = vunpack.c.l.b16 %v161
      %v323 = vunpack.c.l.b16 %v162
      %v324 = vunpack.c.l.b16 %v163
      %v325 = vpack.c.b16 %v310, %v309
      %v326 = vpack.c.b16 %v312, %v311
      %v327 = vpack.c.b16 %v314, %v313
      %v328 = vpack.c.b16 %v316, %v315
      %v329 = vpack.c.b16 %v318, %v317
      %v330 = vpack.c.b16 %v320, %v319
      %v331 = vpack.c.b16 %v322, %v321
      %v332 = vpack.c.b16 %v324, %v323
      %341 = vmatprep.subr.bf16.mxu0 0
      %342 = vmatpush1.bf16.msra.mxu0 %v332
      %343 = vmatprep.subr.bf16.mxu0 0
      %344 = vmatpush1.bf16.msra.mxu0 %v331
      %345 = vmatprep.subr.bf16.mxu0 0
      %346 = vmatpush1.bf16.msra.mxu0 %v330
      %347 = vmatprep.subr.bf16.mxu0 0
      %348 = vmatpush1.bf16.msra.mxu0 %v329
      %349 = vmatprep.subr.bf16.mxu0 0
      %350 = vmatpush1.bf16.msra.mxu0 %v328
      %351 = vmatprep.subr.bf16.mxu0 0
      %352 = vmatpush1.bf16.msra.mxu0 %v327
      %353 = vmatprep.subr.bf16.mxu0 0
      %354 = vmatpush1.bf16.msra.mxu0 %v326
      %355 = vmatprep.subr.bf16.mxu0 0
      %356 = vmatpush1.bf16.msra.mxu0 %v325
      %357 = vmatprep.subr.bf16.mxu0 0
      %358 = vmatpush2.bf16.msra.mxu0 0
      %359 = vmatprep.subr.bf16.mxu0 0
      %360 = vmatpush2.bf16.msra.mxu0 0
      %361 = vmatprep.subr.bf16.mxu0 0
      %362 = vmatpush2.bf16.msra.mxu0 0
      %363 = vmatprep.subr.bf16.mxu0 0
      %364 = vmatpush2.bf16.msra.mxu0 0
      %365 = vmatprep.subr.bf16.mxu0 0
      %366 = vmatpush2.bf16.msra.mxu0 0
      %367 = vmatprep.subr.bf16.mxu0 0
      %368 = vmatpush2.bf16.msra.mxu0 0
      %369 = vmatprep.subr.bf16.mxu0 0
      %370 = vmatpush2.bf16.msra.mxu0 0
      %371 = vmatprep.subr.bf16.mxu0 0
      %372 = vmatpush2.bf16.msra.mxu0 0
      %373 = vmatprep.mubr.bf16.mxu0 0
      %374 = vmatmul.mubr.bf16.gmra.mxu0 %v187
      %v375 = vpop.f32.mrf.mxu0
      %v376 = vadd.f32 %v286, %v375
      %v377 = vpop.f32.mrf.mxu0
      %v378 = vpop.f32.mrf.mxu0
      %v379 = vadd.f32 %v289, %v378
      %v380 = vpop.f32.mrf.mxu0
      %381 = vdwg.mxu0
      %s382 = scalar_lea.vmem %s1, 128
      %v383 = vld [vmem:[%s382] sm:$0xf]
      %v384 = vld [vmem:[%s382 + $0x4] sm:$0xf]
      %v385 = vld [vmem:[%s382 + $0x8] sm:$0xf]
      %v386 = vld [vmem:[%s382 + $0xc] sm:$0xf]
      %v387 = vld [vmem:[%s382 + $0x10] sm:$0xf]
      %v388 = vld [vmem:[%s382 + $0x14] sm:$0xf]
      %v389 = vld [vmem:[%s382 + $0x18] sm:$0xf]
      %v390 = vld [vmem:[%s382 + $0x1c] sm:$0xf]
      %v391 = vld [vmem:[%s382 + $0x20] sm:$0xf]
      %v392 = vld [vmem:[%s382 + $0x24] sm:$0xf]
      %v393 = vld [vmem:[%s382 + $0x28] sm:$0xf]
      %v394 = vld [vmem:[%s382 + $0x2c] sm:$0xf]
      %v395 = vld [vmem:[%s382 + $0x30] sm:$0xf]
      %v396 = vld [vmem:[%s382 + $0x34] sm:$0xf]
      %v397 = vld [vmem:[%s382 + $0x38] sm:$0xf]
      %v398 = vld [vmem:[%s382 + $0x3c] sm:$0xf]
      %vm399 = vcmask 1046528
      %v400 = vrot.slane %v187, 1
      %v401 = vrot.slane %v188, 1
      %v402 = vsel %vm399, %v400, %v401
      %v420 = vunpack.c.l.b16 %v383
      %v421 = vunpack.c.l.b16 %v384
      %v422 = vunpack.c.l.b16 %v385
      %v423 = vunpack.c.l.b16 %v386
      %v424 = vunpack.c.l.b16 %v387
      %v425 = vunpack.c.l.b16 %v388
      %v426 = vunpack.c.l.b16 %v389
      %v427 = vunpack.c.l.b16 %v390
      %v428 = vunpack.c.l.b16 %v391
      %v429 = vunpack.c.l.b16 %v392
      %v430 = vunpack.c.l.b16 %v393
      %v431 = vunpack.c.l.b16 %v394
      %v432 = vunpack.c.l.b16 %v395
      %v433 = vunpack.c.l.b16 %v396
      %v434 = vunpack.c.l.b16 %v397
      %v435 = vunpack.c.l.b16 %v398
      %v436 = vpack.c.b16 %v421, %v420
      %v437 = vpack.c.b16 %v423, %v422
      %v438 = vpack.c.b16 %v425, %v424
      %v439 = vpack.c.b16 %v427, %v426
      %v440 = vpack.c.b16 %v429, %v428
      %v441 = vpack.c.b16 %v431, %v430
      %v442 = vpack.c.b16 %v433, %v432
      %v443 = vpack.c.b16 %v435, %v434
      %452 = vmatprep.subr.bf16.mxu0 0
      %453 = vmatpush1.bf16.msra.mxu0 %v443
      %454 = vmatprep.subr.bf16.mxu0 0
      %455 = vmatpush1.bf16.msra.mxu0 %v442
      %456 = vmatprep.subr.bf16.mxu0 0
      %457 = vmatpush1.bf16.msra.mxu0 %v441
      %458 = vmatprep.subr.bf16.mxu0 0
      %459 = vmatpush1.bf16.msra.mxu0 %v440
      %460 = vmatprep.subr.bf16.mxu0 0
      %461 = vmatpush1.bf16.msra.mxu0 %v439
      %462 = vmatprep.subr.bf16.mxu0 0
      %463 = vmatpush1.bf16.msra.mxu0 %v438
      %464 = vmatprep.subr.bf16.mxu0 0
      %465 = vmatpush1.bf16.msra.mxu0 %v437
      %466 = vmatprep.subr.bf16.mxu0 0
      %467 = vmatpush1.bf16.msra.mxu0 %v436
      %468 = vmatprep.subr.bf16.mxu0 0
      %469 = vmatpush2.bf16.msra.mxu0 0
      %470 = vmatprep.subr.bf16.mxu0 0
      %471 = vmatpush2.bf16.msra.mxu0 0
      %472 = vmatprep.subr.bf16.mxu0 0
      %473 = vmatpush2.bf16.msra.mxu0 0
      %474 = vmatprep.subr.bf16.mxu0 0
      %475 = vmatpush2.bf16.msra.mxu0 0
      %476 = vmatprep.subr.bf16.mxu0 0
      %477 = vmatpush2.bf16.msra.mxu0 0
      %478 = vmatprep.subr.bf16.mxu0 0
      %479 = vmatpush2.bf16.msra.mxu0 0
      %480 = vmatprep.subr.bf16.mxu0 0
      %481 = vmatpush2.bf16.msra.mxu0 0
      %482 = vmatprep.subr.bf16.mxu0 0
      %483 = vmatpush2.bf16.msra.mxu0 0
      %484 = vmatprep.mubr.bf16.mxu0 0
      %485 = vmatmul.mubr.bf16.gmra.mxu0 %v402
      %v486 = vpop.f32.mrf.mxu0
      %v487 = vadd.f32 0.0, %v486
      %v488 = vpop.f32.mrf.mxu0
      %v489 = vpop.f32.mrf.mxu0
      %v490 = vadd.f32 0.0, %v489
      %v491 = vpop.f32.mrf.mxu0
      %492 = vdwg.mxu0
      %v493 = vadd.f32 %v376, %v487
      %v494 = vadd.f32 %v379, %v490
      %495 = vst [vmem:[%s143] sm:$0xff] %v493
      %496 = vst [vmem:[%s143 + $0x8] sm:$0xff] %v494
      %p497 = scmp.lt.s32.totalorder %s13, 1
      %s498 = scalar_select %p497, %s13, 1
      %s499 = smul.addr %s498, 2
      %s500 = smul.addr %s499, 8
      %s501 = scalar_lea.vmem %s2, %s500
      // Predicated region
      $region29: #{dvae_decode.5} parent=27 // pred_check
        %p502 = pneg %p78
      $region30: #{dvae_decode.5} parent=27 // pred_check_branch
        %504 = sbr.rel (%p502) target = $region32
      $region31: #{dvae_decode.5} parent=27 // pred_region
        _
      $region32: #{dvae_decode.5} parent=27 // pred_fallthru
        _
    $region28: #{dvae_decode.5} parent=5 // pred_fallthru
      _
    %p505 = scmp.le.s32.totalorder 2, %s8
    // Predicated region
    $region33: #{dvae_decode.5} parent=5 // pred_check
      %p506 = pneg %p505
    $region34: #{dvae_decode.5} parent=5 // pred_check_branch
      %508 = sbr.rel (%p506) target = $region36
    $region35: #{dvae_decode.5} parent=5 // pred_region
      %s509 = ssub.s32 %s8, 2
      // Predicated region
      $region37: #{dvae_decode.5} parent=35 // pred_check
        %p510 = pneg %p84
      $region38: #{dvae_decode.5} parent=35 // pred_check_branch
        %512 = sbr.rel (%p510) target = $region40
      $region39: #{dvae_decode.5} parent=35 // pred_region
        %p513 = scmp.lt.s32.totalorder %s14, 1
        %s514 = scalar_select %p513, %s14, 1
        %s515 = smul.addr %s514, 2
        %s516 = smul.addr %s515, 8
        %s517 = scalar_lea.vmem %s2, %s516
      $region40: #{dvae_decode.5} parent=35 // pred_fallthru
        _
    $region36: #{dvae_decode.5} parent=5 // pred_fallthru
      _
  $region6: #{dvae_decode.5} parent=0 // loop_footer
    %s12 = sadd.s32 1, %s8
  $region7: #{dvae_decode.5} parent=0 // loop_footer_branch
    %7 = sbr.rel target = $region3
  $region8: #{dvae_decode.5} parent=0 // loop_exit
    _

// kernel: dvae_decode.3
$region0: #{dvae_decode.3}
  #allocation0 [shape = 'u32[]', space=smem, size = 0x4, offset = 0x4, fixed_abs, tag = 'smem constant byte address 0x4 - core index']
  #allocation1 [shape = 'u32[144,128]{1,0:T(1,128)}', space=vmem, size = 0x12000, scoped, tag = 'internal scratch']
  %s0 = inlined_call_operand.vmem [shape: bf16[2,20,128], index: 0, kind: input, shape index: {}]
  %s1 = inlined_call_operand.hbm [shape: bf16[3,128,128], index: 1, kind: input, shape index: {}]
  %s2 = inlined_call_operand.vmem [shape: f32[1,128], index: 2, kind: input, shape index: {}]
  %s3 = inlined_call_operand.hbm [shape: bf16[3,128,128], index: 3, kind: input, shape index: {}]
  %s4 = inlined_call_operand.vmem [shape: f32[1,128], index: 4, kind: input, shape index: {}]
  %s5 = inlined_call_operand.vmem [shape: bf16[2,16,128], index: 5, kind: output, shape index: {}]
  %s6 = sld [smem:[#allocation0]]
  $region61: #{dvae_decode.3} parent=0
    _
  %s8 = ssub.s32 1, %s6
  %s9 = scalar_select 0, %s8, %s6
  $region1: #{dvae_decode.3} parent=0
    #allocation2 [shape = 'u8[98304]{0}', space=vmem, size = 0x18000, scoped, tag = 'input window, operand 1, single buffered']
    #allocation3 [shape = 's32[2]{0}', space=sflag, size = 0x8, scoped, tag = 'scoped memory for dvae_decode.3']
    #allocation4 [shape = 'u8[98304]{0}', space=vmem, size = 0x18000, scoped, tag = 'input window, operand 3, single buffered']
    #allocation5 [shape = 's32[1]{0}', space=sflag, size = 0x4, scoped, tag = 'scoped memory for dvae_decode.3']
    %10 = vsyncpa [#allocation3], 0
    %11 = vsyncpa [#allocation5], 0
    loop: start=0, step=1, limit=4
    $region2: #{dvae_decode.3} parent=1 // loop_pre_header
      _
    $region3: #{dvae_decode.3} parent=1 // loop_header
      %s13 = sphi 0, %s17
      %p14 = scmp.ge.s32.totalorder %s13, 4
      %s23 = sphi 0, %s25
      %s26 = sphi 0, %s23
      %s27 = sphi 0, %s26
      %s43 = sphi 0, %s27
      %s47 = sphi 0, %s47
      %s49 = sphi 0, %s47
      %s50 = sphi 0, %s49
      %s64 = sphi 0, %s50
      %s68 = sphi 0, %s68
      %s70 = sphi 0, %s68
      %s71 = sphi 0, %s70
      %s85 = sphi 0, %s71
      %s89 = sphi 0, %s89
      %s91 = sphi 0, %s89
      %s92 = sphi 0, %s91
      %s106 = sphi 0, %s92
      %s110 = sphi 0, %s110
      %s112 = sphi 0, %s110
      %s113 = sphi 0, %s112
      %s127 = sphi 0, %s113
      %s133 = sphi 0, %s135
      %s136 = sphi 0, %s133
      %s137 = sphi 0, %s136
      %s153 = sphi 0, %s137
    $region4: #{dvae_decode.3} parent=1 // loop_header_branch
      %16 = sbr.rel (%p14) target = $region8
    $region5: #{dvae_decode.3} parent=1 // loop_body
      %s18 = ssub.s32 %s13, 1
      %s19 = ssub.s32 %s13, 2
      %s20 = sadd.s32 %s13, 1
      %s21 = ssub.s32 %s13, %s20
      %p22 = scmp.eq.s32.totalorder %s21, 0
      %s24 = sadd.s32 %s23, 1
      %s25 = scalar_select %p22, %s23, %s24
      %p28 = pneg %p22
      %p29 = scmp.eq.s32.totalorder %s13, 1
      %p30 = por %p28, %p29
      %p31 = scmp.ne.s32.totalorder %s23, %s26
      %p32 = scmp.eq.s32.totalorder %s13, 0
      %p33 = por %p31, %p32
      %p34 = scmp.ne.s32.totalorder %s23, %s26
      %p35 = scmp.eq.s32.totalorder %s18, 1
      %p36 = por %p34, %p35
      %p37 = scmp.ne.s32.totalorder %s26, %s27
      %p38 = scmp.eq.s32.totalorder %s18, 0
      %p39 = por %p37, %p38
      %p40 = scmp.ne.s32.totalorder %s26, %s27
      %p41 = scmp.eq.s32.totalorder %s19, 1
      %p42 = por %p40, %p41
      %p44 = scmp.ne.s32.totalorder %s27, %s43
      %p45 = scmp.eq.s32.totalorder %s19, 0
      %p46 = por %p44, %p45
      %s48 = sadd.s32 %s47, 1
      %p51 = scmp.eq.s32.totalorder %s13, 1
      %p52 = scmp.ne.s32.totalorder %s47, %s49
      %p53 = scmp.eq.s32.totalorder %s13, 0
      %p54 = por %p52, %p53
      %p55 = scmp.ne.s32.totalorder %s47, %s49
      %p56 = scmp.eq.s32.totalorder %s18, 1
      %p57 = por %p55, %p56
      %p58 = scmp.ne.s32.totalorder %s49, %s50
      %p59 = scmp.eq.s32.totalorder %s18, 0
      %p60 = por %p58, %p59
      %p61 = scmp.ne.s32.totalorder %s49, %s50
      %p62 = scmp.eq.s32.totalorder %s19, 1
      %p63 = por %p61, %p62
      %p65 = scmp.ne.s32.totalorder %s50, %s64
      %p66 = scmp.eq.s32.totalorder %s19, 0
      %p67 = por %p65, %p66
      %s69 = sadd.s32 %s68, 1
      %p72 = scmp.eq.s32.totalorder %s13, 1
      %p73 = scmp.ne.s32.totalorder %s68, %s70
      %p74 = scmp.eq.s32.totalorder %s13, 0
      %p75 = por %p73, %p74
      %p76 = scmp.ne.s32.totalorder %s68, %s70
      %p77 = scmp.eq.s32.totalorder %s18, 1
      %p78 = por %p76, %p77
      %p79 = scmp.ne.s32.totalorder %s70, %s71
      %p80 = scmp.eq.s32.totalorder %s18, 0
      %p81 = por %p79, %p80
      %p82 = scmp.ne.s32.totalorder %s70, %s71
      %p83 = scmp.eq.s32.totalorder %s19, 1
      %p84 = por %p82, %p83
      %p86 = scmp.ne.s32.totalorder %s71, %s85
      %p87 = scmp.eq.s32.totalorder %s19, 0
      %p88 = por %p86, %p87
      %s90 = sadd.s32 %s89, 1
      %p93 = scmp.eq.s32.totalorder %s13, 1
      %p94 = scmp.ne.s32.totalorder %s89, %s91
      %p95 = scmp.eq.s32.totalorder %s13, 0
      %p96 = por %p94, %p95
      %p97 = scmp.ne.s32.totalorder %s89, %s91
      %p98 = scmp.eq.s32.totalorder %s18, 1
      %p99 = por %p97, %p98
      %p100 = scmp.ne.s32.totalorder %s91, %s92
      %p101 = scmp.eq.s32.totalorder %s18, 0
      %p102 = por %p100, %p101
      %p103 = scmp.ne.s32.totalorder %s91, %s92
      %p104 = scmp.eq.s32.totalorder %s19, 1
      %p105 = por %p103, %p104
      %p107 = scmp.ne.s32.totalorder %s92, %s106
      %p108 = scmp.eq.s32.totalorder %s19, 0
      %p109 = por %p107, %p108
      %s111 = sadd.s32 %s110, 1
      %p114 = scmp.eq.s32.totalorder %s13, 1
      %p115 = scmp.ne.s32.totalorder %s110, %s112
      %p116 = scmp.eq.s32.totalorder %s13, 0
      %p117 = por %p115, %p116
      %p118 = scmp.ne.s32.totalorder %s110, %s112
      %p119 = scmp.eq.s32.totalorder %s18, 1
      %p120 = por %p118, %p119
      %p121 = scmp.ne.s32.totalorder %s112, %s113
      %p122 = scmp.eq.s32.totalorder %s18, 0
      %p123 = por %p121, %p122
      %p124 = scmp.ne.s32.totalorder %s112, %s113
      %p125 = scmp.eq.s32.totalorder %s19, 1
      %p126 = por %p124, %p125
      %p128 = scmp.ne.s32.totalorder %s113, %s127
      %p129 = scmp.eq.s32.totalorder %s19, 0
      %p130 = por %p128, %p129
      %s131 = ssub.s32 %s13, %s20
      %p132 = scmp.eq.s32.totalorder %s131, 0
      %s134 = sadd.s32 %s133, 1
      %s135 = scalar_select %p132, %s133, %s134
      %p138 = pneg %p132
      %p139 = scmp.eq.s32.totalorder %s13, 1
      %p140 = por %p138, %p139
      %p141 = scmp.ne.s32.totalorder %s133, %s136
      %p142 = scmp.eq.s32.totalorder %s13, 0
      %p143 = por %p141, %p142
      %p144 = scmp.ne.s32.totalorder %s133, %s136
      %p145 = scmp.eq.s32.totalorder %s18, 1
      %p146 = por %p144, %p145
      %p147 = scmp.ne.s32.totalorder %s136, %s137
      %p148 = scmp.eq.s32.totalorder %s18, 0
      %p149 = por %p147, %p148
      %p150 = scmp.ne.s32.totalorder %s136, %s137
      %p151 = scmp.eq.s32.totalorder %s19, 1
      %p152 = por %p150, %p151
      %p154 = scmp.ne.s32.totalorder %s137, %s153
      %p155 = scmp.eq.s32.totalorder %s19, 0
      %p156 = por %p154, %p155
      %p157 = scmp.le.s32.totalorder 1, %s13
      %p158 = scmp.lt.s32.totalorder %s13, 3
      %p159 = pnand %p157, %p158
      %p160 = pneg %p159
      // Predicated region
      $region9: #{dvae_decode.3} parent=5 // pred_check
        _
      $region10: #{dvae_decode.3} parent=5 // pred_check_branch
        %162 = sbr.rel (%p159) target = $region12
      $region11: #{dvae_decode.3} parent=5 // pred_region
        %s163 = ssub.s32 %s13, 1
        // Predicated region
        $region13: #{dvae_decode.3} parent=11 // pred_check
          %p164 = pneg %p60
        $region14: #{dvae_decode.3} parent=11 // pred_check_branch
          %166 = sbr.rel (%p164) target = $region16
        $region15: #{dvae_decode.3} parent=11 // pred_region
          %s168 = ssub.s32 3072, 3072
          %169 = vsyncadd [#allocation3], %s168
          %s170 = sshll.u32 [#allocation2], 4
          %s171 = int_to_ptr.vmem [resolvable:$true] %s170
          %176 = dma.hbm_to_vmem [thread:$0]  %s1, 3072, %s171, [#allocation3], 64, 64, 4
        $region16: #{dvae_decode.3} parent=11 // pred_fallthru
          _
        // Predicated region
        $region17: #{dvae_decode.3} parent=11 // pred_check
          %p177 = pneg %p81
        $region18: #{dvae_decode.3} parent=11 // pred_check_branch
          %179 = sbr.rel (%p177) target = $region20
        $region19: #{dvae_decode.3} parent=11 // pred_region
          _
        $region20: #{dvae_decode.3} parent=11 // pred_fallthru
          _
        // Predicated region
        $region21: #{dvae_decode.3} parent=11 // pred_check
          %p180 = pneg %p102
        $region22: #{dvae_decode.3} parent=11 // pred_check_branch
          %182 = sbr.rel (%p180) target = $region24
        $region23: #{dvae_decode.3} parent=11 // pred_region
          %s184 = ssub.s32 3072, 3072
          %185 = vsyncadd [#allocation5], %s184
          %s186 = sshll.u32 [#allocation4], 4
          %s187 = int_to_ptr.vmem [resolvable:$true] %s186
          %192 = dma.hbm_to_vmem [thread:$0]  %s3, 3072, %s187, [#allocation5], 64, 64, 4
        $region24: #{dvae_decode.3} parent=11 // pred_fallthru
          _
        // Predicated region
        $region25: #{dvae_decode.3} parent=11 // pred_check
          %p193 = pneg %p123
        $region26: #{dvae_decode.3} parent=11 // pred_check_branch
          %195 = sbr.rel (%p193) target = $region28
        $region27: #{dvae_decode.3} parent=11 // pred_region
          _
        $region28: #{dvae_decode.3} parent=11 // pred_fallthru
          _
      $region12: #{dvae_decode.3} parent=5 // pred_fallthru
        _
      %p196 = scmp.lt.s32.totalorder %s13, 2
      // Predicated region
      $region29: #{dvae_decode.3} parent=5 // pred_check
        %p197 = pneg %p196
      $region30: #{dvae_decode.3} parent=5 // pred_check_branch
        %199 = sbr.rel (%p197) target = $region32
      $region31: #{dvae_decode.3} parent=5 // pred_region
        // Predicated region
        $region33: #{dvae_decode.3} parent=31 // pred_check
          %p200 = pneg %p33
        $region34: #{dvae_decode.3} parent=31 // pred_check_branch
          %202 = sbr.rel (%p200) target = $region36
        $region35: #{dvae_decode.3} parent=31 // pred_region
          %p203 = scmp.lt.s32.totalorder %s13, 1
          %s204 = scalar_select %p203, %s13, 1
          %s205 = smul.addr %s204, 3
          %s206 = smul.addr %s205, 4
          %s207 = scalar_lea.vmem %s0, %s206
        $region36: #{dvae_decode.3} parent=31 // pred_fallthru
          _
      $region32: #{dvae_decode.3} parent=5 // pred_fallthru
        _
      %p208 = scmp.le.s32.totalorder 1, %s13
      %p209 = scmp.lt.s32.totalorder %s13, 3
      %p210 = pnand %p208, %p209
      %p211 = pneg %p210
      // Predicated region
      $region37: #{dvae_decode.3} parent=5 // pred_check
        _
      $region38: #{dvae_decode.3} parent=5 // pred_check_branch
        %213 = sbr.rel (%p210) target = $region40
      $region39: #{dvae_decode.3} parent=5 // pred_region
        %s214 = ssub.s32 %s13, 1
        // Predicated region
        $region41: #{dvae_decode.3} parent=39 // pred_check
          %p215 = pneg %p60
        $region42: #{dvae_decode.3} parent=39 // pred_check_branch
          %217 = sbr.rel (%p215) target = $region44
        $region43: #{dvae_decode.3} parent=39 // pred_region
          %218 = dma.done [#allocation3], 3072
        $region44: #{dvae_decode.3} parent=39 // pred_fallthru
          _
        // Predicated region
        $region45: #{dvae_decode.3} parent=39 // pred_check
          %p219 = pneg %p102
        $region46: #{dvae_decode.3} parent=39 // pred_check_branch
          %221 = sbr.rel (%p219) target = $region48
        $region47: #{dvae_decode.3} parent=39 // pred_region
          %222 = dma.done [#allocation5], 3072
        $region48: #{dvae_decode.3} parent=39 // pred_fallthru
          _
        %p223 = scmp.lt.s32.totalorder %s18, 1
        %s224 = scalar_select %p223, %s18, 1
        %s225 = smul.addr %s224, 3
        %s226 = smul.addr %s225, 4
        %s227 = scalar_lea.vmem %s0, %s226
        %p228 = pneg %p39
        %p229 = pneg %p36
        %p230 = pneg %p60
        %p231 = pneg %p57
        %p232 = pneg %p81
        %p233 = pneg %p78
        %p234 = pneg %p102
        %p235 = pneg %p99
        %p236 = pneg %p123
        %p237 = pneg %p120
        %p238 = pneg %p149
        %p239 = pneg %p146
        %p240 = scmp.lt.s32.totalorder %s18, 1
        %s241 = scalar_select %p240, %s18, 1
        %s242 = smul.addr %s241, 2
        %s243 = smul.addr %s242, 4
        %s244 = scalar_lea.vmem %s5, %s243
        %p245 = scmp.lt.s32.totalorder %s18, 1
        %s246 = scalar_select %p245, %s18, 1
        %s247 = smul.addr %s246, 3
        %s248 = smul.addr %s247, 4
        %s249 = scalar_lea.vmem %s0, %s248
        %p250 = scmp.lt.s32.totalorder %s18, 1
        %s251 = scalar_select %p250, %s18, 1
        %s252 = smul.addr %s251, 2
        %s253 = smul.addr %s252, 4
        %s254 = scalar_lea.vmem %s5, %s253
        %v256 = vld [vmem:[%s249] sm:$0xf]
        %v257 = vld [vmem:[%s249 + $0x4] sm:$0xf]
        %v258 = vld [vmem:[%s249 + $0x8] sm:$0x3]
        %v259 = vld [vmem:[#allocation2] sm:$0xf]
        %v260 = vld [vmem:[#allocation2 + $0x4] sm:$0xf]
        %v261 = vld [vmem:[#allocation2 + $0x8] sm:$0xf]
        %v262 = vld [vmem:[#allocation2 + $0xc] sm:$0xf]
        %v263 = vld [vmem:[#allocation2 + $0x10] sm:$0xf]
        %v264 = vld [vmem:[#allocation2 + $0x14] sm:$0xf]
        %v265 = vld [vmem:[#allocation2 + $0x18] sm:$0xf]
        %v266 = vld [vmem:[#allocation2 + $0x1c] sm:$0xf]
        %v267 = vld [vmem:[#allocation2 + $0x20] sm:$0xf]
        %v268 = vld [vmem:[#allocation2 + $0x24] sm:$0xf]
        %v269 = vld [vmem:[#allocation2 + $0x28] sm:$0xf]
        %v270 = vld [vmem:[#allocation2 + $0x2c] sm:$0xf]
        %v271 = vld [vmem:[#allocation2 + $0x30] sm:$0xf]
        %v272 = vld [vmem:[#allocation2 + $0x34] sm:$0xf]
        %v273 = vld [vmem:[#allocation2 + $0x38] sm:$0xf]
        %v274 = vld [vmem:[#allocation2 + $0x3c] sm:$0xf]
        %s275 = scalar_lea.vmem [#allocation2], 64
        %v276 = vld [vmem:[%s275] sm:$0xf]
        %v277 = vld [vmem:[%s275 + $0x4] sm:$0xf]
        %v278 = vld [vmem:[%s275 + $0x8] sm:$0xf]
        %v279 = vld [vmem:[%s275 + $0xc] sm:$0xf]
        %v280 = vld [vmem:[%s275 + $0x10] sm:$0xf]
        %v281 = vld [vmem:[%s275 + $0x14] sm:$0xf]
        %v282 = vld [vmem:[%s275 + $0x18] sm:$0xf]
        %v283 = vld [vmem:[%s275 + $0x1c] sm:$0xf]
        %v284 = vld [vmem:[%s275 + $0x20] sm:$0xf]
        %v285 = vld [vmem:[%s275 + $0x24] sm:$0xf]
        %v286 = vld [vmem:[%s275 + $0x28] sm:$0xf]
        %v287 = vld [vmem:[%s275 + $0x2c] sm:$0xf]
        %v288 = vld [vmem:[%s275 + $0x30] sm:$0xf]
        %v289 = vld [vmem:[%s275 + $0x34] sm:$0xf]
        %v290 = vld [vmem:[%s275 + $0x38] sm:$0xf]
        %v291 = vld [vmem:[%s275 + $0x3c] sm:$0xf]
        %v295 = vunpack.c.l.b16 %v256
        %v296 = vunpack.c.l.b16 %v257
        %v297 = vunpack.c.l.b16 %v258
        %v298 = vpack.c.b16 %v296, %v295
        %v299 = vpack.c.b16 %v297, %v297
        %vm300 = vsmask.f32 7424
        %v302 = vshrl.u32 %v298, 16
        %v304 = vshll.u32 %v298, 16
        %v306 = vrot.slane %v304, 1
        %v307 = vor.u32 %v302, %v306
        %v309 = vshll.u32 %v299, 16
        %v311 = vrot.slane %v309, 1
        %v312 = vsel %vm300, %v307, %v311
        %v313 = vshrl.u32 %v299, 16
        %v315 = vor.u32 %v313, %v311
        %v334 = vunpack.c.l.b16 %v276
        %v335 = vunpack.c.l.b16 %v277
        %v336 = vunpack.c.l.b16 %v278
        %v337 = vunpack.c.l.b16 %v279
        %v338 = vunpack.c.l.b16 %v280
        %v339 = vunpack.c.l.b16 %v281
        %v340 = vunpack.c.l.b16 %v282
        %v341 = vunpack.c.l.b16 %v283
        %v342 = vunpack.c.l.b16 %v284
        %v343 = vunpack.c.l.b16 %v285
        %v344 = vunpack.c.l.b16 %v286
        %v345 = vunpack.c.l.b16 %v287
        %v346 = vunpack.c.l.b16 %v288
        %v347 = vunpack.c.l.b16 %v289
        %v348 = vunpack.c.l.b16 %v290
        %v349 = vunpack.c.l.b16 %v291
        %v350 = vpack.c.b16 %v335, %v334
        %v351 = vpack.c.b16 %v337, %v336
        %v352 = vpack.c.b16 %v339, %v338
        %v353 = vpack.c.b16 %v341, %v340
        %v354 = vpack.c.b16 %v343, %v342
        %v355 = vpack.c.b16 %v345, %v344
        %v356 = vpack.c.b16 %v347, %v346
        %v357 = vpack.c.b16 %v349, %v348
        %366 = vmatprep.subr.bf16.mxu0 0
        %367 = vmatpush1.bf16.msra.mxu0 %v357
        %368 = vmatprep.subr.bf16.mxu0 0
        %369 = vmatpush1.bf16.msra.mxu0 %v356
        %370 = vmatprep.subr.bf16.mxu0 0
        %371 = vmatpush1.bf16.msra.mxu0 %v355
        %372 = vmatprep.subr.bf16.mxu0 0
        %373 = vmatpush1.bf16.msra.mxu0 %v354
        %374 = vmatprep.subr.bf16.mxu0 0
        %375 = vmatpush1.bf16.msra.mxu0 %v353
        %376 = vmatprep.subr.bf16.mxu0 0
        %377 = vmatpush1.bf16.msra.mxu0 %v352
        %378 = vmatprep.subr.bf16.mxu0 0
        %379 = vmatpush1.bf16.msra.mxu0 %v351
        %380 = vmatprep.subr.bf16.mxu0 0
        %381 = vmatpush1.bf16.msra.mxu0 %v350
        %382 = vmatprep.subr.bf16.mxu0 0
        %383 = vmatpush2.bf16.msra.mxu0 0
        %384 = vmatprep.subr.bf16.mxu0 0
        %385 = vmatpush2.bf16.msra.mxu0 0
        %386 = vmatprep.subr.bf16.mxu0 0
        %387 = vmatpush2.bf16.msra.mxu0 0
        %388 = vmatprep.subr.bf16.mxu0 0
        %389 = vmatpush2.bf16.msra.mxu0 0
        %390 = vmatprep.subr.bf16.mxu0 0
        %391 = vmatpush2.bf16.msra.mxu0 0
        %392 = vmatprep.subr.bf16.mxu0 0
        %393 = vmatpush2.bf16.msra.mxu0 0
        %394 = vmatprep.subr.bf16.mxu0 0
        %395 = vmatpush2.bf16.msra.mxu0 0
        %396 = vmatprep.subr.bf16.mxu0 0
        %397 = vmatpush2.bf16.msra.mxu0 0
        %398 = vmatprep.mubr.bf16.mxu0 0
        %399 = vmatmul.mubr.bf16.gmra.mxu0 %v312
        %v400 = vpop.f32.mrf.mxu0
        %v401 = vadd.f32 0.0, %v400
        %v402 = vpop.f32.mrf.mxu0
        %v403 = vpop.f32.mrf.mxu0
        %v404 = vadd.f32 0.0, %v403
        %v405 = vpop.f32.mrf.mxu0
        %406 = vmatprep.mubr.bf16.mxu0 0
        %407 = vmatmul.mubr.bf16.gmra.mxu0 %v315
        %v408 = vpop.f32.mrf.mxu0
        %v409 = vadd.f32 0.0, %v408
        %v410 = vpop.f32.mrf.mxu0
        %v411 = vpop.f32.mrf.mxu0
        %v412 = vpop.f32.mrf.mxu0
        %413 = vdwg.mxu0
        %v432 = vunpack.c.l.b16 %v259
        %v433 = vunpack.c.l.b16 %v260
        %v434 = vunpack.c.l.b16 %v261
        %v435 = vunpack.c.l.b16 %v262
        %v436 = vunpack.c.l.b16 %v263
        %v437 = vunpack.c.l.b16 %v264
        %v438 = vunpack.c.l.b16 %v265
        %v439 = vunpack.c.l.b16 %v266
        %v440 = vunpack.c.l.b16 %v267
        %v441 = vunpack.c.l.b16 %v268
        %v442 = vunpack.c.l.b16 %v269
        %v443 = vunpack.c.l.b16 %v270
        %v444 = vunpack.c.l.b16 %v271
        %v445 = vunpack.c.l.b16 %v272
        %v446 = vunpack.c.l.b16 %v273
        %v447 = vunpack.c.l.b16 %v274
        %v448 = vpack.c.b16 %v433, %v432
        %v449 = vpack.c.b16 %v435, %v434
        %v450 = vpack.c.b16 %v437, %v436
        %v451 = vpack.c.b16 %v439, %v438
        %v452 = vpack.c.b16 %v441, %v440
        %v453 = vpack.c.b16 %v443, %v442
        %v454 = vpack.c.b16 %v445, %v444
        %v455 = vpack.c.b16 %v447, %v446
        %464 = vmatprep.subr.bf16.mxu0 0
        %465 = vmatpush1.bf16.msra.mxu0 %v455
        %466 = vmatprep.subr.bf16.mxu0 0
        %467 = vmatpush1.bf16.msra.mxu0 %v454
        %468 = vmatprep.subr.bf16.mxu0 0
        %469 = vmatpush1.bf16.msra.mxu0 %v453
        %470 = vmatprep.subr.bf16.mxu0 0
        %471 = vmatpush1.bf16.msra.mxu0 %v452
        %472 = vmatprep.subr.bf16.mxu0 0
        %473 = vmatpush1.bf16.msra.mxu0 %v451
        %474 = vmatprep.subr.bf16.mxu0 0
        %475 = vmatpush1.bf16.msra.mxu0 %v450
        %476 = vmatprep.subr.bf16.mxu0 0
        %477 = vmatpush1.bf16.msra.mxu0 %v449
        %478 = vmatprep.subr.bf16.mxu0 0
        %479 = vmatpush1.bf16.msra.mxu0 %v448
        %480 = vmatprep.subr.bf16.mxu0 0
        %481 = vmatpush2.bf16.msra.mxu0 0
        %482 = vmatprep.subr.bf16.mxu0 0
        %483 = vmatpush2.bf16.msra.mxu0 0
        %484 = vmatprep.subr.bf16.mxu0 0
        %485 = vmatpush2.bf16.msra.mxu0 0
        %486 = vmatprep.subr.bf16.mxu0 0
        %487 = vmatpush2.bf16.msra.mxu0 0
        %488 = vmatprep.subr.bf16.mxu0 0
        %489 = vmatpush2.bf16.msra.mxu0 0
        %490 = vmatprep.subr.bf16.mxu0 0
        %491 = vmatpush2.bf16.msra.mxu0 0
        %492 = vmatprep.subr.bf16.mxu0 0
        %493 = vmatpush2.bf16.msra.mxu0 0
        %494 = vmatprep.subr.bf16.mxu0 0
        %495 = vmatpush2.bf16.msra.mxu0 0
        %496 = vmatprep.mubr.bf16.mxu0 0
        %497 = vmatmul.mubr.bf16.gmra.mxu0 %v298
        %v498 = vpop.f32.mrf.mxu0
        %v499 = vadd.f32 %v401, %v498
        %v500 = vpop.f32.mrf.mxu0
        %v501 = vpop.f32.mrf.mxu0
        %v502 = vadd.f32 %v404, %v501
        %v503 = vpop.f32.mrf.mxu0
        %504 = vmatprep.mubr.bf16.mxu0 0
        %505 = vmatmul.mubr.bf16.gmra.mxu0 %v299
        %v506 = vpop.f32.mrf.mxu0
        %v507 = vadd.f32 %v409, %v506
        %v508 = vpop.f32.mrf.mxu0
        %v509 = vpop.f32.mrf.mxu0
        %v510 = vpop.f32.mrf.mxu0
        %511 = vdwg.mxu0
        %s512 = scalar_lea.vmem [#allocation2], 128
        %v513 = vld [vmem:[%s512] sm:$0xf]
        %v514 = vld [vmem:[%s512 + $0x4] sm:$0xf]
        %v515 = vld [vmem:[%s512 + $0x8] sm:$0xf]
        %v516 = vld [vmem:[%s512 + $0xc] sm:$0xf]
        %v517 = vld [vmem:[%s512 + $0x10] sm:$0xf]
        %v518 = vld [vmem:[%s512 + $0x14] sm:$0xf]
        %v519 = vld [vmem:[%s512 + $0x18] sm:$0xf]
        %v520 = vld [vmem:[%s512 + $0x1c] sm:$0xf]
        %v521 = vld [vmem:[%s512 + $0x20] sm:$0xf]
        %v522 = vld [vmem:[%s512 + $0x24] sm:$0xf]
        %v523 = vld [vmem:[%s512 + $0x28] sm:$0xf]
        %v524 = vld [vmem:[%s512 + $0x2c] sm:$0xf]
        %v525 = vld [vmem:[%s512 + $0x30] sm:$0xf]
        %v526 = vld [vmem:[%s512 + $0x34] sm:$0xf]
        %v527 = vld [vmem:[%s512 + $0x38] sm:$0xf]
        %v528 = vld [vmem:[%s512 + $0x3c] sm:$0xf]
        %vm529 = vcmask 1046528
        %v530 = vrot.slane %v298, 1
        %v531 = vrot.slane %v299, 1
        %v532 = vsel %vm529, %v530, %v531
        %v551 = vunpack.c.l.b16 %v513
        %v552 = vunpack.c.l.b16 %v514
        %v553 = vunpack.c.l.b16 %v515
        %v554 = vunpack.c.l.b16 %v516
        %v555 = vunpack.c.l.b16 %v517
        %v556 = vunpack.c.l.b16 %v518
        %v557 = vunpack.c.l.b16 %v519
        %v558 = vunpack.c.l.b16 %v520
        %v559 = vunpack.c.l.b16 %v521
        %v560 = vunpack.c.l.b16 %v522
        %v561 = vunpack.c.l.b16 %v523
        %v562 = vunpack.c.l.b16 %v524
        %v563 = vunpack.c.l.b16 %v525
        %v564 = vunpack.c.l.b16 %v526
        %v565 = vunpack.c.l.b16 %v527
        %v566 = vunpack.c.l.b16 %v528
        %v567 = vpack.c.b16 %v552, %v551
        %v568 = vpack.c.b16 %v554, %v553
        %v569 = vpack.c.b16 %v556, %v555
        %v570 = vpack.c.b16 %v558, %v557
        %v571 = vpack.c.b16 %v560, %v559
        %v572 = vpack.c.b16 %v562, %v561
        %v573 = vpack.c.b16 %v564, %v563
        %v574 = vpack.c.b16 %v566, %v565
        %583 = vmatprep.subr.bf16.mxu0 0
        %584 = vmatpush1.bf16.msra.mxu0 %v574
        %585 = vmatprep.subr.bf16.mxu0 0
        %586 = vmatpush1.bf16.msra.mxu0 %v573
        %587 = vmatprep.subr.bf16.mxu0 0
        %588 = vmatpush1.bf16.msra.mxu0 %v572
        %589 = vmatprep.subr.bf16.mxu0 0
        %590 = vmatpush1.bf16.msra.mxu0 %v571
        %591 = vmatprep.subr.bf16.mxu0 0
        %592 = vmatpush1.bf16.msra.mxu0 %v570
        %593 = vmatprep.subr.bf16.mxu0 0
        %594 = vmatpush1.bf16.msra.mxu0 %v569
        %595 = vmatprep.subr.bf16.mxu0 0
        %596 = vmatpush1.bf16.msra.mxu0 %v568
        %597 = vmatprep.subr.bf16.mxu0 0
        %598 = vmatpush1.bf16.msra.mxu0 %v567
        %599 = vmatprep.subr.bf16.mxu0 0
        %600 = vmatpush2.bf16.msra.mxu0 0
        %601 = vmatprep.subr.bf16.mxu0 0
        %602 = vmatpush2.bf16.msra.mxu0 0
        %603 = vmatprep.subr.bf16.mxu0 0
        %604 = vmatpush2.bf16.msra.mxu0 0
        %605 = vmatprep.subr.bf16.mxu0 0
        %606 = vmatpush2.bf16.msra.mxu0 0
        %607 = vmatprep.subr.bf16.mxu0 0
        %608 = vmatpush2.bf16.msra.mxu0 0
        %609 = vmatprep.subr.bf16.mxu0 0
        %610 = vmatpush2.bf16.msra.mxu0 0
        %611 = vmatprep.subr.bf16.mxu0 0
        %612 = vmatpush2.bf16.msra.mxu0 0
        %613 = vmatprep.subr.bf16.mxu0 0
        %614 = vmatpush2.bf16.msra.mxu0 0
        %615 = vmatprep.mubr.bf16.mxu0 0
        %616 = vmatmul.mubr.bf16.gmra.mxu0 %v532
        %v617 = vpop.f32.mrf.mxu0
        %v618 = vadd.f32 0.0, %v617
        %v619 = vpop.f32.mrf.mxu0
        %v620 = vpop.f32.mrf.mxu0
        %v621 = vadd.f32 0.0, %v620
        %v622 = vpop.f32.mrf.mxu0
        %623 = vmatprep.mubr.bf16.mxu0 0
        %624 = vmatmul.mubr.bf16.gmra.mxu0 %v531
        %v625 = vpop.f32.mrf.mxu0
        %v626 = vadd.f32 0.0, %v625
        %v627 = vpop.f32.mrf.mxu0
        %v628 = vpop.f32.mrf.mxu0
        %v629 = vpop.f32.mrf.mxu0
        %630 = vdwg.mxu0
        %v631 = vadd.f32 %v499, %v618
        %v632 = vadd.f32 %v502, %v621
        %v633 = vadd.f32 %v507, %v626
        %v634 = vld [vmem:[%s2] sm:$0x1]
        %v636 = vlaneseq
        %v637 = vshrl.u32 %v636, 7
        %v638 = vsub.s32 0, %v637
        %v639 = vrot.slane %v634, %v638
        %v641 = vadd.f32 %v631, %v639
        %v642 = vadd.f32 %v632, %v639
        %v643 = vadd.f32 %v633, %v639
        %v644 = vmul.f32 %v641, 0.5
        %v645 = vmul.f32 %v642, 0.5
        %v646 = vmul.f32 %v643, 0.5
        %v647 = vmul.f32 %v641, 0.70710677
        %v648 = vmul.f32 %v642, 0.70710677
        %v649 = vmul.f32 %v643, 0.70710677
        %v650 = verf.f32.pop %v647
        %v651 = verf.f32.pop %v648
        %v652 = verf.f32.pop %v649
        %v653 = vadd.f32 %v650, 1.0
        %v654 = vadd.f32 %v651, 1.0
        %v655 = vadd.f32 %v652, 1.0
        %v656 = vmul.f32 %v644, %v653
        %v657 = vmul.f32 %v645, %v654
        %v658 = vmul.f32 %v646, %v655
        %v659 = vlaneseq
        %v660 = vshrl.u32 %v659, 7
        %v661 = vadd.s32 %v660, 8
        %v662 = vadd.s32 %v660, 16
        %vm663 = vcmp.ge.s32.totalorder %v660, 1
        %vm664 = vcmp.ge.s32.totalorder %v661, 1
        %vm665 = vcmp.ge.s32.totalorder %v662, 1
        %vm666 = vcmp.le.s32.totalorder %v660, 16
        %vm667 = vcmp.le.s32.totalorder %v661, 16
        %vm668 = vcmp.le.s32.totalorder %v662, 16
        %vm669 = vmand %vm663, %vm666
        %vm670 = vmand %vm664, %vm667
        %vm671 = vmand %vm665, %vm668
        %v672 = vsel %vm669, 1, 0
        %v673 = vsel %vm670, 1, 0
        %v674 = vsel %vm671, 1, 0
        %vm675 = vcmp.eq.s32.totalorder %v672, 1
        %vm676 = vcmp.eq.s32.totalorder %v673, 1
        %vm677 = vcmp.eq.s32.totalorder %v674, 1
        %v678 = vsel %vm675, %v656, 0.0
        %v679 = vsel %vm676, %v657, 0.0
        %v680 = vsel %vm677, %v658, 0.0
        %v681 = vpack.c.bf16 %v679, %v678
        %v682 = vpack.c.bf16 %v680, %v680
        %v683 = vld [vmem:[#allocation4] sm:$0xf]
        %v684 = vld [vmem:[#allocation4 + $0x4] sm:$0xf]
        %v685 = vld [vmem:[#allocation4 + $0x8] sm:$0xf]
        %v686 = vld [vmem:[#allocation4 + $0xc] sm:$0xf]
        %v687 = vld [vmem:[#allocation4 + $0x10] sm:$0xf]
        %v688 = vld [vmem:[#allocation4 + $0x14] sm:$0xf]
        %v689 = vld [vmem:[#allocation4 + $0x18] sm:$0xf]
        %v690 = vld [vmem:[#allocation4 + $0x1c] sm:$0xf]
        %v691 = vld [vmem:[#allocation4 + $0x20] sm:$0xf]
        %v692 = vld [vmem:[#allocation4 + $0x24] sm:$0xf]
        %v693 = vld [vmem:[#allocation4 + $0x28] sm:$0xf]
        %v694 = vld [vmem:[#allocation4 + $0x2c] sm:$0xf]
        %v695 = vld [vmem:[#allocation4 + $0x30] sm:$0xf]
        %v696 = vld [vmem:[#allocation4 + $0x34] sm:$0xf]
        %v697 = vld [vmem:[#allocation4 + $0x38] sm:$0xf]
        %v698 = vld [vmem:[#allocation4 + $0x3c] sm:$0xf]
        %s699 = scalar_lea.vmem [#allocation4], 64
        %v700 = vld [vmem:[%s699] sm:$0xf]
        %v701 = vld [vmem:[%s699 + $0x4] sm:$0xf]
        %v702 = vld [vmem:[%s699 + $0x8] sm:$0xf]
        %v703 = vld [vmem:[%s699 + $0xc] sm:$0xf]
        %v704 = vld [vmem:[%s699 + $0x10] sm:$0xf]
        %v705 = vld [vmem:[%s699 + $0x14] sm:$0xf]
        %v706 = vld [vmem:[%s699 + $0x18] sm:$0xf]
        %v707 = vld [vmem:[%s699 + $0x1c] sm:$0xf]
        %v708 = vld [vmem:[%s699 + $0x20] sm:$0xf]
        %v709 = vld [vmem:[%s699 + $0x24] sm:$0xf]
        %v710 = vld [vmem:[%s699 + $0x28] sm:$0xf]
        %v711 = vld [vmem:[%s699 + $0x2c] sm:$0xf]
        %v712 = vld [vmem:[%s699 + $0x30] sm:$0xf]
        %v713 = vld [vmem:[%s699 + $0x34] sm:$0xf]
        %v714 = vld [vmem:[%s699 + $0x38] sm:$0xf]
        %v715 = vld [vmem:[%s699 + $0x3c] sm:$0xf]
        %v717 = vshrl.u32 %v681, 16
        %v719 = vshll.u32 %v681, 16
        %v721 = vrot.slane %v719, 1
        %v722 = vor.u32 %v717, %v721
        %v724 = vshll.u32 %v682, 16
        %v726 = vrot.slane %v724, 1
        %v727 = vsel %vm300, %v722, %v726
        %v745 = vunpack.c.l.b16 %v700
        %v746 = vunpack.c.l.b16 %v701
        %v747 = vunpack.c.l.b16 %v702
        %v748 = vunpack.c.l.b16 %v703
        %v749 = vunpack.c.l.b16 %v704
        %v750 = vunpack.c.l.b16 %v705
        %v751 = vunpack.c.l.b16 %v706
        %v752 = vunpack.c.l.b16 %v707
        %v753 = vunpack.c.l.b16 %v708
        %v754 = vunpack.c.l.b16 %v709
        %v755 = vunpack.c.l.b16 %v710
        %v756 = vunpack.c.l.b16 %v711
        %v757 = vunpack.c.l.b16 %v712
        %v758 = vunpack.c.l.b16 %v713
        %v759 = vunpack.c.l.b16 %v714
        %v760 = vunpack.c.l.b16 %v715
        %v761 = vpack.c.b16 %v746, %v745
        %v762 = vpack.c.b16 %v748, %v747
        %v763 = vpack.c.b16 %v750, %v749
        %v764 = vpack.c.b16 %v752, %v751
        %v765 = vpack.c.b16 %v754, %v753
        %v766 = vpack.c.b16 %v756, %v755
        %v767 = vpack.c.b16 %v758, %v757
        %v768 = vpack.c.b16 %v760, %v759
        %777 = vmatprep.subr.bf16.mxu0 0
        %778 = vmatpush1.bf16.msra.mxu0 %v768
        %779 = vmatprep.subr.bf16.mxu0 0
        %780 = vmatpush1.bf16.msra.mxu0 %v767
        %781 = vmatprep.subr.bf16.mxu0 0
        %782 = vmatpush1.bf16.msra.mxu0 %v766
        %783 = vmatprep.subr.bf16.mxu0 0
        %784 = vmatpush1.bf16.msra.mxu0 %v765
        %785 = vmatprep.subr.bf16.mxu0 0
        %786 = vmatpush1.bf16.msra.mxu0 %v764
        %787 = vmatprep.subr.bf16.mxu0 0
        %788 = vmatpush1.bf16.msra.mxu0 %v763
        %789 = vmatprep.subr.bf16.mxu0 0
        %790 = vmatpush1.bf16.msra.mxu0 %v762
        %791 = vmatprep.subr.bf16.mxu0 0
        %792 = vmatpush1.bf16.msra.mxu0 %v761
        %793 = vmatprep.subr.bf16.mxu0 0
        %794 = vmatpush2.bf16.msra.mxu0 0
        %795 = vmatprep.subr.bf16.mxu0 0
        %796 = vmatpush2.bf16.msra.mxu0 0
        %797 = vmatprep.subr.bf16.mxu0 0
        %798 = vmatpush2.bf16.msra.mxu0 0
        %799 = vmatprep.subr.bf16.mxu0 0
        %800 = vmatpush2.bf16.msra.mxu0 0
        %801 = vmatprep.subr.bf16.mxu0 0
        %802 = vmatpush2.bf16.msra.mxu0 0
        %803 = vmatprep.subr.bf16.mxu0 0
        %804 = vmatpush2.bf16.msra.mxu0 0
        %805 = vmatprep.subr.bf16.mxu0 0
        %806 = vmatpush2.bf16.msra.mxu0 0
        %807 = vmatprep.subr.bf16.mxu0 0
        %808 = vmatpush2.bf16.msra.mxu0 0
        %809 = vmatprep.mubr.bf16.mxu0 0
        %810 = vmatmul.mubr.bf16.gmra.mxu0 %v727
        %v811 = vpop.f32.mrf.mxu0
        %v812 = vadd.f32 0.0, %v811
        %v813 = vpop.f32.mrf.mxu0
        %v814 = vpop.f32.mrf.mxu0
        %v815 = vadd.f32 0.0, %v814
        %v816 = vpop.f32.mrf.mxu0
        %817 = vdwg.mxu0
        %v834 = vunpack.c.l.b16 %v683
        %v835 = vunpack.c.l.b16 %v684
        %v836 = vunpack.c.l.b16 %v685
        %v837 = vunpack.c.l.b16 %v686
        %v838 = vunpack.c.l.b16 %v687
        %v839 = vunpack.c.l.b16 %v688
        %v840 = vunpack.c.l.b16 %v689
        %v841 = vunpack.c.l.b16 %v690
        %v842 = vunpack.c.l.b16 %v691
        %v843 = vunpack.c.l.b16 %v692
        %v844 = vunpack.c.l.b16 %v693
        %v845 = vunpack.c.l.b16 %v694
        %v846 = vunpack.c.l.b16 %v695
        %v847 = vunpack.c.l.b16 %v696
        %v848 = vunpack.c.l.b16 %v697
        %v849 = vunpack.c.l.b16 %v698
        %v850 = vpack.c.b16 %v835, %v834
        %v851 = vpack.c.b16 %v837, %v836
        %v852 = vpack.c.b16 %v839, %v838
        %v853 = vpack.c.b16 %v841, %v840
        %v854 = vpack.c.b16 %v843, %v842
        %v855 = vpack.c.b16 %v845, %v844
        %v856 = vpack.c.b16 %v847, %v846
        %v857 = vpack.c.b16 %v849, %v848
        %866 = vmatprep.subr.bf16.mxu0 0
        %867 = vmatpush1.bf16.msra.mxu0 %v857
        %868 = vmatprep.subr.bf16.mxu0 0
        %869 = vmatpush1.bf16.msra.mxu0 %v856
        %870 = vmatprep.subr.bf16.mxu0 0
        %871 = vmatpush1.bf16.msra.mxu0 %v855
        %872 = vmatprep.subr.bf16.mxu0 0
        %873 = vmatpush1.bf16.msra.mxu0 %v854
        %874 = vmatprep.subr.bf16.mxu0 0
        %875 = vmatpush1.bf16.msra.mxu0 %v853
        %876 = vmatprep.subr.bf16.mxu0 0
        %877 = vmatpush1.bf16.msra.mxu0 %v852
        %878 = vmatprep.subr.bf16.mxu0 0
        %879 = vmatpush1.bf16.msra.mxu0 %v851
        %880 = vmatprep.subr.bf16.mxu0 0
        %881 = vmatpush1.bf16.msra.mxu0 %v850
        %882 = vmatprep.subr.bf16.mxu0 0
        %883 = vmatpush2.bf16.msra.mxu0 0
        %884 = vmatprep.subr.bf16.mxu0 0
        %885 = vmatpush2.bf16.msra.mxu0 0
        %886 = vmatprep.subr.bf16.mxu0 0
        %887 = vmatpush2.bf16.msra.mxu0 0
        %888 = vmatprep.subr.bf16.mxu0 0
        %889 = vmatpush2.bf16.msra.mxu0 0
        %890 = vmatprep.subr.bf16.mxu0 0
        %891 = vmatpush2.bf16.msra.mxu0 0
        %892 = vmatprep.subr.bf16.mxu0 0
        %893 = vmatpush2.bf16.msra.mxu0 0
        %894 = vmatprep.subr.bf16.mxu0 0
        %895 = vmatpush2.bf16.msra.mxu0 0
        %896 = vmatprep.subr.bf16.mxu0 0
        %897 = vmatpush2.bf16.msra.mxu0 0
        %898 = vmatprep.mubr.bf16.mxu0 0
        %899 = vmatmul.mubr.bf16.gmra.mxu0 %v681
        %v900 = vpop.f32.mrf.mxu0
        %v901 = vadd.f32 %v812, %v900
        %v902 = vpop.f32.mrf.mxu0
        %v903 = vpop.f32.mrf.mxu0
        %v904 = vadd.f32 %v815, %v903
        %v905 = vpop.f32.mrf.mxu0
        %906 = vdwg.mxu0
        %s907 = scalar_lea.vmem [#allocation4], 128
        %v908 = vld [vmem:[%s907] sm:$0xf]
        %v909 = vld [vmem:[%s907 + $0x4] sm:$0xf]
        %v910 = vld [vmem:[%s907 + $0x8] sm:$0xf]
        %v911 = vld [vmem:[%s907 + $0xc] sm:$0xf]
        %v912 = vld [vmem:[%s907 + $0x10] sm:$0xf]
        %v913 = vld [vmem:[%s907 + $0x14] sm:$0xf]
        %v914 = vld [vmem:[%s907 + $0x18] sm:$0xf]
        %v915 = vld [vmem:[%s907 + $0x1c] sm:$0xf]
        %v916 = vld [vmem:[%s907 + $0x20] sm:$0xf]
        %v917 = vld [vmem:[%s907 + $0x24] sm:$0xf]
        %v918 = vld [vmem:[%s907 + $0x28] sm:$0xf]
        %v919 = vld [vmem:[%s907 + $0x2c] sm:$0xf]
        %v920 = vld [vmem:[%s907 + $0x30] sm:$0xf]
        %v921 = vld [vmem:[%s907 + $0x34] sm:$0xf]
        %v922 = vld [vmem:[%s907 + $0x38] sm:$0xf]
        %v923 = vld [vmem:[%s907 + $0x3c] sm:$0xf]
        %v926 = vrot.slane %v681, 1
        %v927 = vrot.slane %v682, 1
        %v928 = vsel %vm529, %v926, %v927
        %v946 = vunpack.c.l.b16 %v908
        %v947 = vunpack.c.l.b16 %v909
        %v948 = vunpack.c.l.b16 %v910
        %v949 = vunpack.c.l.b16 %v911
        %v950 = vunpack.c.l.b16 %v912
        %v951 = vunpack.c.l.b16 %v913
        %v952 = vunpack.c.l.b16 %v914
        %v953 = vunpack.c.l.b16 %v915
        %v954 = vunpack.c.l.b16 %v916
        %v955 = vunpack.c.l.b16 %v917
        %v956 = vunpack.c.l.b16 %v918
        %v957 = vunpack.c.l.b16 %v919
        %v958 = vunpack.c.l.b16 %v920
        %v959 = vunpack.c.l.b16 %v921
        %v960 = vunpack.c.l.b16 %v922
        %v961 = vunpack.c.l.b16 %v923
        %v962 = vpack.c.b16 %v947, %v946
        %v963 = vpack.c.b16 %v949, %v948
        %v964 = vpack.c.b16 %v951, %v950
        %v965 = vpack.c.b16 %v953, %v952
        %v966 = vpack.c.b16 %v955, %v954
        %v967 = vpack.c.b16 %v957, %v956
        %v968 = vpack.c.b16 %v959, %v958
        %v969 = vpack.c.b16 %v961, %v960
        %978 = vmatprep.subr.bf16.mxu0 0
        %979 = vmatpush1.bf16.msra.mxu0 %v969
        %980 = vmatprep.subr.bf16.mxu0 0
        %981 = vmatpush1.bf16.msra.mxu0 %v968
        %982 = vmatprep.subr.bf16.mxu0 0
        %983 = vmatpush1.bf16.msra.mxu0 %v967
        %984 = vmatprep.subr.bf16.mxu0 0
        %985 = vmatpush1.bf16.msra.mxu0 %v966
        %986 = vmatprep.subr.bf16.mxu0 0
        %987 = vmatpush1.bf16.msra.mxu0 %v965
        %988 = vmatprep.subr.bf16.mxu0 0
        %989 = vmatpush1.bf16.msra.mxu0 %v964
        %990 = vmatprep.subr.bf16.mxu0 0
        %991 = vmatpush1.bf16.msra.mxu0 %v963
        %992 = vmatprep.subr.bf16.mxu0 0
        %993 = vmatpush1.bf16.msra.mxu0 %v962
        %994 = vmatprep.subr.bf16.mxu0 0
        %995 = vmatpush2.bf16.msra.mxu0 0
        %996 = vmatprep.subr.bf16.mxu0 0
        %997 = vmatpush2.bf16.msra.mxu0 0
        %998 = vmatprep.subr.bf16.mxu0 0
        %999 = vmatpush2.bf16.msra.mxu0 0
        %1000 = vmatprep.subr.bf16.mxu0 0
        %1001 = vmatpush2.bf16.msra.mxu0 0
        %1002 = vmatprep.subr.bf16.mxu0 0
        %1003 = vmatpush2.bf16.msra.mxu0 0
        %1004 = vmatprep.subr.bf16.mxu0 0
        %1005 = vmatpush2.bf16.msra.mxu0 0
        %1006 = vmatprep.subr.bf16.mxu0 0
        %1007 = vmatpush2.bf16.msra.mxu0 0
        %1008 = vmatprep.subr.bf16.mxu0 0
        %1009 = vmatpush2.bf16.msra.mxu0 0
        %1010 = vmatprep.mubr.bf16.mxu0 0
        %1011 = vmatmul.mubr.bf16.gmra.mxu0 %v928
        %v1012 = vpop.f32.mrf.mxu0
        %v1013 = vadd.f32 0.0, %v1012
        %v1014 = vpop.f32.mrf.mxu0
        %v1015 = vpop.f32.mrf.mxu0
        %v1016 = vadd.f32 0.0, %v1015
        %v1017 = vpop.f32.mrf.mxu0
        %1018 = vdwg.mxu0
        %v1019 = vadd.f32 %v901, %v1013
        %v1020 = vadd.f32 %v904, %v1016
        %v1021 = vld [vmem:[%s4] sm:$0x1]
        %v1023 = vlaneseq
        %v1024 = vshrl.u32 %v1023, 7
        %v1025 = vsub.s32 0, %v1024
        %v1026 = vrot.slane %v1021, %v1025
        %v1028 = vadd.f32 %v1019, %v1026
        %v1029 = vadd.f32 %v1020, %v1026
        %v1030 = vpack.c.bf16 %v1029, %v1028
        %v1032 = vunpack.c.l.b16 %v1030
        %v1033 = vunpack.c.h.b16 %v1030
        %v1034 = vpack.c.b16 %v1032, %v1032
        %v1035 = vpack.c.b16 %v1033, %v1033
        %1038 = vst [vmem:[%s254] sm:$0xf] %v1034
        %1039 = vst [vmem:[%s254 + $0x4] sm:$0xf] %v1035
        %p1040 = scmp.lt.s32.totalorder %s18, 1
        %s1041 = scalar_select %p1040, %s18, 1
        %s1042 = smul.addr %s1041, 2
        %s1043 = smul.addr %s1042, 4
        %s1044 = scalar_lea.vmem %s5, %s1043
        // Predicated region
        $region49: #{dvae_decode.3} parent=39 // pred_check
          %p1045 = pneg %p146
        $region50: #{dvae_decode.3} parent=39 // pred_check_branch
          %1047 = sbr.rel (%p1045) target = $region52
        $region51: #{dvae_decode.3} parent=39 // pred_region
          _
        $region52: #{dvae_decode.3} parent=39 // pred_fallthru
          _
      $region40: #{dvae_decode.3} parent=5 // pred_fallthru
        _
      %p1048 = scmp.le.s32.totalorder 2, %s13
      // Predicated region
      $region53: #{dvae_decode.3} parent=5 // pred_check
        %p1049 = pneg %p1048
      $region54: #{dvae_decode.3} parent=5 // pred_check_branch
        %1051 = sbr.rel (%p1049) target = $region56
      $region55: #{dvae_decode.3} parent=5 // pred_region
        %s1052 = ssub.s32 %s13, 2
        // Predicated region
        $region57: #{dvae_decode.3} parent=55 // pred_check
          %p1053 = pneg %p152
        $region58: #{dvae_decode.3} parent=55 // pred_check_branch
          %1055 = sbr.rel (%p1053) target = $region60
        $region59: #{dvae_decode.3} parent=55 // pred_region
          %p1056 = scmp.lt.s32.totalorder %s19, 1
          %s1057 = scalar_select %p1056, %s19, 1
          %s1058 = smul.addr %s1057, 2
          %s1059 = smul.addr %s1058, 4
          %s1060 = scalar_lea.vmem %s5, %s1059
        $region60: #{dvae_decode.3} parent=55 // pred_fallthru
          _
      $region56: #{dvae_decode.3} parent=5 // pred_fallthru
        _
    $region6: #{dvae_decode.3} parent=1 // loop_footer
      %s17 = sadd.s32 1, %s13
    $region7: #{dvae_decode.3} parent=1 // loop_footer_branch
      %12 = sbr.rel target = $region3
    $region8: #{dvae_decode.3} parent=1 // loop_exit
      _
    %1061 = vsyncpa [#allocation3], 1
    %s1062 = scalar_lea.sflag [#allocation3], 1
    %1063 = vsyncpa %s1062, 1
    %1064 = vsyncpa [#allocation5], 1

</llo_original>
